<compile_context>
chip_gen: v7x
topology: tpu7x:2x2x1
jax: 0.10.0
libtpu: 0.0.40
codegen_flags: <defaults>
</compile_context>

<pallas_src>
import jax
import jax.numpy as jnp
from jax import lax
from jax.experimental import pallas as pl
from jax.experimental.pallas import tpu as pltpu

GROUPS = 4
LANE = 128


# --------------------------------------------------------------------------
# Fused whole-stack TCN kernel factory.
# --------------------------------------------------------------------------
def make_tcn_kernel(num_layers, K, dilations, ds_flags, Bt, L, Cp):
    """Kernel running the full TemporalBlock stack on one batch tile.

    Activations live as a (Bt*L, Cp) bf16 slab resident in VMEM for the whole
    stack.  Dropout is identity (eval semantics).
    """
    R = Bt * L
    any_ds = any(ds_flags)
    # layer index -> slot in the stacked downsample weights (or None)
    ds_slot = []
    cnt = 0
    for f in ds_flags:
        if f:
            ds_slot.append(cnt)
            cnt += 1
        else:
            ds_slot.append(None)

    def kernel(x_ref, w1_ref, b1_ref, w2_ref, b2_ref, *rest):
        if any_ds:
            wd_ref, bd_ref, out_ref = rest
        else:
            (out_ref,) = rest

        # Per-row time index (for causal masking after roll), hoisted once.
        t2 = lax.broadcasted_iota(jnp.int32, (L, Cp), 0)
        t_idx = t2 if Bt == 1 else jnp.concatenate([t2] * Bt, axis=0)  # (R, Cp)

        # Memoized "keep" masks per shift: traced once per unique shift and
        # reused by conv1/conv2 of the same layer (same dilation).
        keep_masks = {}

        def keep_mask(s):
            if s not in keep_masks:
                keep_masks[s] = t_idx >= s
            return keep_masks[s]

        def causal_dilated_conv(h_b16, w_ref, layer, dil):
            # out[t] = sum_j x[t - (K-1-j)*dil] @ W[j]   (zero for t < shift).
            # Tap K-1 is unshifted; other taps: matmul, roll down the time
            # axis by s rows (XLU), then zero the first s rows per sequence.
            acc = jnp.dot(h_b16, w_ref[layer, K - 1],
                          preferred_element_type=jnp.float32)
            for j in range(K - 1):
                s = (K - 1 - j) * dil
                y = jnp.dot(h_b16, w_ref[layer, j],
                            preferred_element_type=jnp.float32)
                y = pltpu.roll(y, s, axis=0)
                acc = acc + jnp.where(keep_mask(s), y, 0.0)
            return acc

        h = x_ref[...].reshape(R, Cp)                    # bf16 activations
        for i in range(num_layers):
            dil = dilations[i]
            # conv1 -> chomp -> ReLU   (dropout = identity)
            a1 = causal_dilated_conv(h, w1_ref, i, dil) + b1_ref[i]
            h1 = jnp.maximum(a1, 0.0).astype(jnp.bfloat16)
            # conv2 -> chomp -> ReLU   (dropout = identity)
            a2 = causal_dilated_conv(h1, w2_ref, i, dil) + b2_ref[i]
            h2 = jnp.maximum(a2, 0.0)
            # residual: 1x1 conv only when the layer really has a downsample
            if ds_flags[i]:
                res = jnp.dot(h, wd_ref[ds_slot[i]],
                              preferred_element_type=jnp.float32)
                res = res + bd_ref[ds_slot[i]]
            else:
                res = h.astype(jnp.float32)
            h = jnp.maximum(h2 + res, 0.0).astype(jnp.bfloat16)

        out_ref[...] = h.reshape(Bt, L, Cp)

    return kernel


def _pick_batch_tile(B, L, target_rows=1024):
    """Largest divisor of B whose tile has <= target_rows flattened rows,
    preferring >= 2 grid steps when B > 1 (keeps the batch axis shardable
    across cores and gives the pipeline something to overlap)."""
    bt = 1
    for cand in range(1, B + 1):
        if B % cand != 0 or cand * L > target_rows:
            continue
        if B > 1 and cand == B:
            continue
        bt = cand
    return bt


# --------------------------------------------------------------------------
# Parameter setup / packing (glue, plain JAX).
# --------------------------------------------------------------------------
def weight_norm_effective(v, g):
    """PyTorch weight_norm (dim=0): w = g * v / ||v|| over dims (1, 2)."""
    norm = jnp.sqrt(jnp.sum(v * v, axis=(1, 2), keepdims=True))
    return v * (g[:, None, None] / norm)


def to_block_diag_padded(w_torch, Cin, Cout, K, Cp):
    """(Cout, Cin//GROUPS, K) grouped-conv weight -> (K, Cp, Cp) block-diagonal
    matmul weight (lane-dense padded) for the (rows=time, cols=channels) layout."""
    cin_g = Cin // GROUPS
    cout_g = Cout // GROUPS
    w = jnp.zeros((K, Cp, Cp), jnp.float32)
    for g in range(GROUPS):
        blk = w_torch[g * cout_g:(g + 1) * cout_g]     # (cout_g, cin_g, K)
        blk = jnp.transpose(blk, (2, 1, 0))            # (K, cin_g, cout_g)
        w = w.at[:, g * cin_g:(g + 1) * cin_g,
                 g * cout_g:(g + 1) * cout_g].set(blk)
    return w


def pad_matrix(w, Cp):
    r, c = w.shape
    return jnp.zeros((Cp, Cp), jnp.float32).at[:r, :c].set(w)


def pad_bias(b, Cp):
    return jnp.zeros((1, Cp), jnp.float32).at[0, :b.shape[0]].set(b)


def init_block_params(key, Cin, Cout, K):
    keys = jax.random.split(key, 8)
    cin_g = Cin // GROUPS
    cout_g = Cout // GROUPS
    v1 = jax.random.normal(keys[0], (Cout, cin_g, K), jnp.float32) * 0.05
    g1 = jax.random.uniform(keys[1], (Cout,), jnp.float32, 0.5, 1.5)
    b1 = jax.random.normal(keys[2], (Cout,), jnp.float32) * 0.05
    v2 = jax.random.normal(keys[3], (Cout, cout_g, K), jnp.float32) * 0.05
    g2 = jax.random.uniform(keys[4], (Cout,), jnp.float32, 0.5, 1.5)
    b2 = jax.random.normal(keys[5], (Cout,), jnp.float32) * 0.05
    if Cin != Cout:
        wd = jax.random.normal(keys[6], (Cout, Cin, 1), jnp.float32) * 0.01
        bd = jax.random.normal(keys[7], (Cout,), jnp.float32) * 0.05
    else:
        wd, bd = None, None
    return dict(w1=weight_norm_effective(v1, g1), b1=b1,
                w2=weight_norm_effective(v2, g2), b2=b2,
                wd=wd, bd=bd)


# --------------------------------------------------------------------------
# TemporalConvNet forward: one fused pallas_call for the whole stack.
# --------------------------------------------------------------------------
def tcn_forward_pallas(x_ncl, params_list, num_channels, K):
    """x_ncl: PyTorch-style (B, C, L). Returns (B, num_channels[-1], L) f32."""
    B, C0, L = x_ncl.shape
    num_layers = len(params_list)
    dilations = tuple(2 ** i for i in range(num_layers))
    Cp = LANE * int(pl.cdiv(max([C0] + list(num_channels)), LANE))

    w1_l, b1_l, w2_l, b2_l = [], [], [], []
    wd_l, bd_l, ds_flags = [], [], []
    cin = C0
    for i, prm in enumerate(params_list):
        cout = num_channels[i]
        w1_l.append(to_block_diag_padded(prm["w1"], cin, cout, K, Cp))
        b1_l.append(pad_bias(prm["b1"], Cp))
        w2_l.append(to_block_diag_padded(prm["w2"], cout, cout, K, Cp))
        b2_l.append(pad_bias(prm["b2"], Cp))
        if prm["wd"] is not None:
            wd_l.append(pad_matrix(jnp.transpose(prm["wd"][:, :, 0], (1, 0)), Cp))
            bd_l.append(pad_bias(prm["bd"], Cp))
            ds_flags.append(True)
        else:
            ds_flags.append(False)
        cin = cout

    w1_all = jnp.stack(w1_l).astype(jnp.bfloat16)        # (nl, K, Cp, Cp)
    w2_all = jnp.stack(w2_l).astype(jnp.bfloat16)
    b1_all = jnp.stack(b1_l)                             # (nl, 1, Cp) f32
    b2_all = jnp.stack(b2_l)
    any_ds = any(ds_flags)
    if any_ds:
        wd_all = jnp.stack(wd_l).astype(jnp.bfloat16)    # (n_ds, Cp, Cp)
        bd_all = jnp.stack(bd_l)                         # (n_ds, 1, Cp)

    # (B, C, L) -> lane-dense (B, L, Cp) bf16 activations.
    x = jnp.transpose(x_ncl, (0, 2, 1)).astype(jnp.float32)
    x = jnp.pad(x, ((0, 0), (0, 0), (0, Cp - C0))).astype(jnp.bfloat16)

    Bt = _pick_batch_tile(B, L)
    kernel = make_tcn_kernel(num_layers, K, dilations, tuple(ds_flags),
                             Bt, L, Cp)

    # Weight/bias index_maps are constant across the grid -> fetched once,
    # kept resident in VMEM for every batch tile.
    in_specs = [
        pl.BlockSpec((Bt, L, Cp), lambda b: (b, 0, 0)),                 # x
        pl.BlockSpec((num_layers, K, Cp, Cp), lambda b: (0, 0, 0, 0)),  # w1
        pl.BlockSpec((num_layers, 1, Cp), lambda b: (0, 0, 0)),         # b1
        pl.BlockSpec((num_layers, K, Cp, Cp), lambda b: (0, 0, 0, 0)),  # w2
        pl.BlockSpec((num_layers, 1, Cp), lambda b: (0, 0, 0)),         # b2
    ]
    args = [x, w1_all, b1_all, w2_all, b2_all]
    if any_ds:
        n_ds = int(sum(ds_flags))
        in_specs += [
            pl.BlockSpec((n_ds, Cp, Cp), lambda b: (0, 0, 0)),          # wd
            pl.BlockSpec((n_ds, 1, Cp), lambda b: (0, 0, 0)),           # bd
        ]
        args += [wd_all, bd_all]

    flops_per_row = 0
    for i in range(num_layers):
        flops_per_row += 2 * 2 * K * Cp * Cp              # conv1 + conv2
        if ds_flags[i]:
            flops_per_row += 2 * Cp * Cp                  # downsample
    bytes_accessed = (x.size * 2 + B * L * Cp * 2
                      + w1_all.size * 2 + w2_all.size * 2
                      + b1_all.size * 4 + b2_all.size * 4)
    if any_ds:
        bytes_accessed += wd_all.size * 2 + bd_all.size * 4

    out = pl.pallas_call(
        kernel,
        out_shape=jax.ShapeDtypeStruct((B, L, Cp), jnp.bfloat16),
        grid_spec=pltpu.PrefetchScalarGridSpec(
            num_scalar_prefetch=0,
            grid=(B // Bt,),
            in_specs=in_specs,
            out_specs=pl.BlockSpec((Bt, L, Cp), lambda b: (b, 0, 0)),
        ),
        compiler_params=pltpu.CompilerParams(
            dimension_semantics=("parallel",)),
        cost_estimate=pl.CostEstimate(
            flops=int(B * L * flops_per_row),
            transcendentals=0,
            bytes_accessed=int(bytes_accessed)),
    )(*args)

    out = out[:, :, :num_channels[-1]].astype(jnp.float32)
    return jnp.transpose(out, (0, 2, 1))                  # back to (B, C, L)


# --------------------------------------------------------------------------
# Pure-JAX reference (mirrors kernel numerics: bf16 operands, f32 accumulate).
# --------------------------------------------------------------------------
def _ref_block(x, w1, b1, w2, b2, wd, bd, dilation, K):
    p = (K - 1) * dilation
    dn = ('NCH', 'OIH', 'NCH')
    xb = x.astype(jnp.bfloat16)
    y = lax.conv_general_dilated(
        xb, w1.astype(jnp.bfloat16), (1,), [(p, p)], rhs_dilation=(dilation,),
        dimension_numbers=dn, feature_group_count=GROUPS,
        preferred_element_type=jnp.float32)
    y = jnp.maximum(y[:, :, :y.shape[2] - p] + b1[None, :, None], 0.0)
    y = lax.conv_general_dilated(
        y.astype(jnp.bfloat16), w2.astype(jnp.bfloat16), (1,), [(p, p)],
        rhs_dilation=(dilation,), dimension_numbers=dn,
        feature_group_count=GROUPS, preferred_element_type=jnp.float32)
    y = jnp.maximum(y[:, :, :y.shape[2] - p] + b2[None, :, None], 0.0)
    if wd is None:
        res = x
    else:
        res = lax.conv_general_dilated(
            xb, wd.astype(jnp.bfloat16), (1,), [(0, 0)], dimension_numbers=dn,
            preferred_element_type=jnp.float32) + bd[None, :, None]
    out = jnp.maximum(y + res, 0.0)
    return out.astype(jnp.bfloat16).astype(jnp.float32)


def tcn_forward_ref(x_ncl, params_list, K):
    x = x_ncl.astype(jnp.bfloat16).astype(jnp.float32)
    for i, prm in enumerate(params_list):
        x = _ref_block(x, prm["w1"], prm["b1"], prm["w2"], prm["b2"],
                       prm["wd"], prm["bd"], 2 ** i, K)
    return x


if __name__ == "__main__":
    # TODO(synk): Dropout (p=0.2) is stochastic; implemented as identity
    # (inference / eval semantics).
    key = jax.random.PRNGKey(0)
    B, num_inputs, L = 2, 8, 16          # channels divisible by groups=4
    num_channels = [16, 16]
    K = 2                                # kernel_size=2 (TCN default)

    k_x, k_p = jax.random.split(key)
    x = jax.random.normal(k_x, (B, num_inputs, L), jnp.float32)

    params_list = []
    cin = num_inputs
    block_keys = jax.random.split(k_p, len(num_channels))
    for i, cout in enumerate(num_channels):
        params_list.append(init_block_params(block_keys[i], cin, cout, K))
        cin = cout

    out = tcn_forward_pallas(x, params_list, num_channels, K)
    out = jax.block_until_ready(out)

    ref = tcn_forward_ref(x, params_list, K)
    assert out.shape == (B, num_channels[-1], L), out.shape
    max_err = float(jnp.max(jnp.abs(out - ref)))
    assert jnp.allclose(out, ref, atol=5e-2, rtol=5e-2), max_err

    print("KERNEL_OK")
</pallas_src>

<mosaic_0001>
module attributes {stable_mosaic.version = 11 : i64} {
  func.func @kernel(%arg0: i32, %arg1: memref<1x16x128xbf16, #tpu.memory_space<vmem>>, %arg2: memref<2x2x128x128xbf16, #tpu.memory_space<vmem>>, %arg3: memref<2x1x128xf32, #tpu.memory_space<vmem>>, %arg4: memref<2x2x128x128xbf16, #tpu.memory_space<vmem>>, %arg5: memref<2x1x128xf32, #tpu.memory_space<vmem>>, %arg6: memref<1x128x128xbf16, #tpu.memory_space<vmem>>, %arg7: memref<1x1x128xf32, #tpu.memory_space<vmem>>, %arg8: memref<1x16x128xbf16, #tpu.memory_space<vmem>>) attributes {dimension_semantics = [#tpu.dimension_semantics<parallel>], iteration_bounds = array<i64: 2>, scalar_prefetch = 0 : i64, scratch_operands = 0 : i64, tpu.core_type = #tpu.core_type<tc>, window_params = [{transform_indices = @transform_0, window_bounds = array<i64: 1, 16, 128>}, {pipeline_mode = #tpu.pipeline_mode<synchronous>, transform_indices = @transform_1, window_bounds = array<i64: 2, 2, 128, 128>}, {pipeline_mode = #tpu.pipeline_mode<synchronous>, transform_indices = @transform_2, window_bounds = array<i64: 2, 1, 128>}, {pipeline_mode = #tpu.pipeline_mode<synchronous>, transform_indices = @transform_3, window_bounds = array<i64: 2, 2, 128, 128>}, {pipeline_mode = #tpu.pipeline_mode<synchronous>, transform_indices = @transform_4, window_bounds = array<i64: 2, 1, 128>}, {pipeline_mode = #tpu.pipeline_mode<synchronous>, transform_indices = @transform_5, window_bounds = array<i64: 1, 128, 128>}, {pipeline_mode = #tpu.pipeline_mode<synchronous>, transform_indices = @transform_6, window_bounds = array<i64: 1, 1, 128>}, {transform_indices = @transform_7, window_bounds = array<i64: 1, 16, 128>}]} {
    %0 = tpu.iota {dimensions = array<i32: 0>} : vector<16x128xi32>
    %c0 = arith.constant 0 : index
    %c0_0 = arith.constant 0 : index
    %c0_1 = arith.constant 0 : index
    %1 = vector.load %arg1[%c0, %c0_0, %c0_1] : memref<1x16x128xbf16, #tpu.memory_space<vmem>>, vector<1x16x128xbf16>
    %2 = vector.shape_cast %1 : vector<1x16x128xbf16> to vector<16x128xbf16>
    %c0_2 = arith.constant 0 : index
    %c1 = arith.constant 1 : index
    %c0_3 = arith.constant 0 : index
    %c0_4 = arith.constant 0 : index
    %3 = vector.load %arg2[%c0_2, %c1, %c0_3, %c0_4] : memref<2x2x128x128xbf16, #tpu.memory_space<vmem>>, vector<1x1x128x128xbf16>
    %4 = vector.shape_cast %3 : vector<1x1x128x128xbf16> to vector<128x128xbf16>
    %cst = arith.constant dense<0.000000e+00> : vector<16x128xf32>
    %5 = tpu.matmul %2, %4, %cst {dimension_numbers = #tpu.dot_dimension_numbers<[1], [0], [0], [1], [0, 0, 1, 1], [], []>} : vector<16x128xbf16>, vector<128x128xbf16>, vector<16x128xf32> -> vector<16x128xf32>
    %c0_5 = arith.constant 0 : index
    %c0_6 = arith.constant 0 : index
    %c0_7 = arith.constant 0 : index
    %c0_8 = arith.constant 0 : index
    %6 = vector.load %arg2[%c0_5, %c0_6, %c0_7, %c0_8] : memref<2x2x128x128xbf16, #tpu.memory_space<vmem>>, vector<1x1x128x128xbf16>
    %7 = vector.shape_cast %6 : vector<1x1x128x128xbf16> to vector<128x128xbf16>
    %cst_9 = arith.constant dense<0.000000e+00> : vector<16x128xf32>
    %8 = tpu.matmul %2, %7, %cst_9 {dimension_numbers = #tpu.dot_dimension_numbers<[1], [0], [0], [1], [0, 0, 1, 1], [], []>} : vector<16x128xbf16>, vector<128x128xbf16>, vector<16x128xf32> -> vector<16x128xf32>
    %c1_i32 = arith.constant 1 : i32
    %9 = tpu.dynamic_rotate %8 by %c1_i32 dim 0 : vector<16x128xf32>, i32 -> vector<16x128xf32>
    %c1_i32_10 = arith.constant 1 : i32
    %10 = vector.broadcast %c1_i32_10 : i32 to vector<16x128xi32>
    %11 = arith.cmpi sge, %0, %10 : vector<16x128xi32>
    %cst_11 = arith.constant 0.000000e+00 : f32
    %12 = vector.broadcast %cst_11 : f32 to vector<16x128xf32>
    %13 = arith.select %11, %9, %12 : vector<16x128xi1>, vector<16x128xf32>
    %14 = arith.addf %5, %13 : vector<16x128xf32>
    %c0_12 = arith.constant 0 : index
    %c0_13 = arith.constant 0 : index
    %c0_14 = arith.constant 0 : index
    %15 = vector.load %arg3[%c0_12, %c0_13, %c0_14] : memref<2x1x128xf32, #tpu.memory_space<vmem>>, vector<1x1x128xf32>
    %16 = vector.shape_cast %15 : vector<1x1x128xf32> to vector<1x128xf32>
    %17 = vector.broadcast %16 : vector<1x128xf32> to vector<16x128xf32>
    %18 = arith.addf %14, %17 : vector<16x128xf32>
    %cst_15 = arith.constant 0.000000e+00 : f32
    %19 = vector.broadcast %cst_15 : f32 to vector<16x128xf32>
    %20 = arith.maximumf %18, %19 : vector<16x128xf32>
    %21 = arith.truncf %20 : vector<16x128xf32> to vector<16x128xbf16>
    %c0_16 = arith.constant 0 : index
    %c1_17 = arith.constant 1 : index
    %c0_18 = arith.constant 0 : index
    %c0_19 = arith.constant 0 : index
    %22 = vector.load %arg4[%c0_16, %c1_17, %c0_18, %c0_19] : memref<2x2x128x128xbf16, #tpu.memory_space<vmem>>, vector<1x1x128x128xbf16>
    %23 = vector.shape_cast %22 : vector<1x1x128x128xbf16> to vector<128x128xbf16>
    %cst_20 = arith.constant dense<0.000000e+00> : vector<16x128xf32>
    %24 = tpu.matmul %21, %23, %cst_20 {dimension_numbers = #tpu.dot_dimension_numbers<[1], [0], [0], [1], [0, 0, 1, 1], [], []>} : vector<16x128xbf16>, vector<128x128xbf16>, vector<16x128xf32> -> vector<16x128xf32>
    %c0_21 = arith.constant 0 : index
    %c0_22 = arith.constant 0 : index
    %c0_23 = arith.constant 0 : index
    %c0_24 = arith.constant 0 : index
    %25 = vector.load %arg4[%c0_21, %c0_22, %c0_23, %c0_24] : memref<2x2x128x128xbf16, #tpu.memory_space<vmem>>, vector<1x1x128x128xbf16>
    %26 = vector.shape_cast %25 : vector<1x1x128x128xbf16> to vector<128x128xbf16>
    %cst_25 = arith.constant dense<0.000000e+00> : vector<16x128xf32>
    %27 = tpu.matmul %21, %26, %cst_25 {dimension_numbers = #tpu.dot_dimension_numbers<[1], [0], [0], [1], [0, 0, 1, 1], [], []>} : vector<16x128xbf16>, vector<128x128xbf16>, vector<16x128xf32> -> vector<16x128xf32>
    %c1_i32_26 = arith.constant 1 : i32
    %28 = tpu.dynamic_rotate %27 by %c1_i32_26 dim 0 : vector<16x128xf32>, i32 -> vector<16x128xf32>
    %cst_27 = arith.constant 0.000000e+00 : f32
    %29 = vector.broadcast %cst_27 : f32 to vector<16x128xf32>
    %30 = arith.select %11, %28, %29 : vector<16x128xi1>, vector<16x128xf32>
    %31 = arith.addf %24, %30 : vector<16x128xf32>
    %c0_28 = arith.constant 0 : index
    %c0_29 = arith.constant 0 : index
    %c0_30 = arith.constant 0 : index
    %32 = vector.load %arg5[%c0_28, %c0_29, %c0_30] : memref<2x1x128xf32, #tpu.memory_space<vmem>>, vector<1x1x128xf32>
    %33 = vector.shape_cast %32 : vector<1x1x128xf32> to vector<1x128xf32>
    %34 = vector.broadcast %33 : vector<1x128xf32> to vector<16x128xf32>
    %35 = arith.addf %31, %34 : vector<16x128xf32>
    %cst_31 = arith.constant 0.000000e+00 : f32
    %36 = vector.broadcast %cst_31 : f32 to vector<16x128xf32>
    %37 = arith.maximumf %35, %36 : vector<16x128xf32>
    %c0_32 = arith.constant 0 : index
    %c0_33 = arith.constant 0 : index
    %c0_34 = arith.constant 0 : index
    %38 = vector.load %arg6[%c0_32, %c0_33, %c0_34] : memref<1x128x128xbf16, #tpu.memory_space<vmem>>, vector<1x128x128xbf16>
    %39 = vector.shape_cast %38 : vector<1x128x128xbf16> to vector<128x128xbf16>
    %cst_35 = arith.constant dense<0.000000e+00> : vector<16x128xf32>
    %40 = tpu.matmul %2, %39, %cst_35 {dimension_numbers = #tpu.dot_dimension_numbers<[1], [0], [0], [1], [0, 0, 1, 1], [], []>} : vector<16x128xbf16>, vector<128x128xbf16>, vector<16x128xf32> -> vector<16x128xf32>
    %c0_36 = arith.constant 0 : index
    %c0_37 = arith.constant 0 : index
    %c0_38 = arith.constant 0 : index
    %41 = vector.load %arg7[%c0_36, %c0_37, %c0_38] : memref<1x1x128xf32, #tpu.memory_space<vmem>>, vector<1x1x128xf32>
    %42 = vector.shape_cast %41 : vector<1x1x128xf32> to vector<1x128xf32>
    %43 = vector.broadcast %42 : vector<1x128xf32> to vector<16x128xf32>
    %44 = arith.addf %40, %43 : vector<16x128xf32>
    %45 = arith.addf %37, %44 : vector<16x128xf32>
    %cst_39 = arith.constant 0.000000e+00 : f32
    %46 = vector.broadcast %cst_39 : f32 to vector<16x128xf32>
    %47 = arith.maximumf %45, %46 : vector<16x128xf32>
    %48 = arith.truncf %47 : vector<16x128xf32> to vector<16x128xbf16>
    %c1_40 = arith.constant 1 : index
    %c1_41 = arith.constant 1 : index
    %c0_42 = arith.constant 0 : index
    %c0_43 = arith.constant 0 : index
    %49 = vector.load %arg2[%c1_40, %c1_41, %c0_42, %c0_43] : memref<2x2x128x128xbf16, #tpu.memory_space<vmem>>, vector<1x1x128x128xbf16>
    %50 = vector.shape_cast %49 : vector<1x1x128x128xbf16> to vector<128x128xbf16>
    %cst_44 = arith.constant dense<0.000000e+00> : vector<16x128xf32>
    %51 = tpu.matmul %48, %50, %cst_44 {dimension_numbers = #tpu.dot_dimension_numbers<[1], [0], [0], [1], [0, 0, 1, 1], [], []>} : vector<16x128xbf16>, vector<128x128xbf16>, vector<16x128xf32> -> vector<16x128xf32>
    %c1_45 = arith.constant 1 : index
    %c0_46 = arith.constant 0 : index
    %c0_47 = arith.constant 0 : index
    %c0_48 = arith.constant 0 : index
    %52 = vector.load %arg2[%c1_45, %c0_46, %c0_47, %c0_48] : memref<2x2x128x128xbf16, #tpu.memory_space<vmem>>, vector<1x1x128x128xbf16>
    %53 = vector.shape_cast %52 : vector<1x1x128x128xbf16> to vector<128x128xbf16>
    %cst_49 = arith.constant dense<0.000000e+00> : vector<16x128xf32>
    %54 = tpu.matmul %48, %53, %cst_49 {dimension_numbers = #tpu.dot_dimension_numbers<[1], [0], [0], [1], [0, 0, 1, 1], [], []>} : vector<16x128xbf16>, vector<128x128xbf16>, vector<16x128xf32> -> vector<16x128xf32>
    %c2_i32 = arith.constant 2 : i32
    %55 = tpu.dynamic_rotate %54 by %c2_i32 dim 0 : vector<16x128xf32>, i32 -> vector<16x128xf32>
    %c2_i32_50 = arith.constant 2 : i32
    %56 = vector.broadcast %c2_i32_50 : i32 to vector<16x128xi32>
    %57 = arith.cmpi sge, %0, %56 : vector<16x128xi32>
    %cst_51 = arith.constant 0.000000e+00 : f32
    %58 = vector.broadcast %cst_51 : f32 to vector<16x128xf32>
    %59 = arith.select %57, %55, %58 : vector<16x128xi1>, vector<16x128xf32>
    %60 = arith.addf %51, %59 : vector<16x128xf32>
    %c1_52 = arith.constant 1 : index
    %c0_53 = arith.constant 0 : index
    %c0_54 = arith.constant 0 : index
    %61 = vector.load %arg3[%c1_52, %c0_53, %c0_54] : memref<2x1x128xf32, #tpu.memory_space<vmem>>, vector<1x1x128xf32>
    %62 = vector.shape_cast %61 : vector<1x1x128xf32> to vector<1x128xf32>
    %63 = vector.broadcast %62 : vector<1x128xf32> to vector<16x128xf32>
    %64 = arith.addf %60, %63 : vector<16x128xf32>
    %cst_55 = arith.constant 0.000000e+00 : f32
    %65 = vector.broadcast %cst_55 : f32 to vector<16x128xf32>
    %66 = arith.maximumf %64, %65 : vector<16x128xf32>
    %67 = arith.truncf %66 : vector<16x128xf32> to vector<16x128xbf16>
    %c1_56 = arith.constant 1 : index
    %c1_57 = arith.constant 1 : index
    %c0_58 = arith.constant 0 : index
    %c0_59 = arith.constant 0 : index
    %68 = vector.load %arg4[%c1_56, %c1_57, %c0_58, %c0_59] : memref<2x2x128x128xbf16, #tpu.memory_space<vmem>>, vector<1x1x128x128xbf16>
    %69 = vector.shape_cast %68 : vector<1x1x128x128xbf16> to vector<128x128xbf16>
    %cst_60 = arith.constant dense<0.000000e+00> : vector<16x128xf32>
    %70 = tpu.matmul %67, %69, %cst_60 {dimension_numbers = #tpu.dot_dimension_numbers<[1], [0], [0], [1], [0, 0, 1, 1], [], []>} : vector<16x128xbf16>, vector<128x128xbf16>, vector<16x128xf32> -> vector<16x128xf32>
    %c1_61 = arith.constant 1 : index
    %c0_62 = arith.constant 0 : index
    %c0_63 = arith.constant 0 : index
    %c0_64 = arith.constant 0 : index
    %71 = vector.load %arg4[%c1_61, %c0_62, %c0_63, %c0_64] : memref<2x2x128x128xbf16, #tpu.memory_space<vmem>>, vector<1x1x128x128xbf16>
    %72 = vector.shape_cast %71 : vector<1x1x128x128xbf16> to vector<128x128xbf16>
    %cst_65 = arith.constant dense<0.000000e+00> : vector<16x128xf32>
    %73 = tpu.matmul %67, %72, %cst_65 {dimension_numbers = #tpu.dot_dimension_numbers<[1], [0], [0], [1], [0, 0, 1, 1], [], []>} : vector<16x128xbf16>, vector<128x128xbf16>, vector<16x128xf32> -> vector<16x128xf32>
    %c2_i32_66 = arith.constant 2 : i32
    %74 = tpu.dynamic_rotate %73 by %c2_i32_66 dim 0 : vector<16x128xf32>, i32 -> vector<16x128xf32>
    %cst_67 = arith.constant 0.000000e+00 : f32
    %75 = vector.broadcast %cst_67 : f32 to vector<16x128xf32>
    %76 = arith.select %57, %74, %75 : vector<16x128xi1>, vector<16x128xf32>
    %77 = arith.addf %70, %76 : vector<16x128xf32>
    %c1_68 = arith.constant 1 : index
    %c0_69 = arith.constant 0 : index
    %c0_70 = arith.constant 0 : index
    %78 = vector.load %arg5[%c1_68, %c0_69, %c0_70] : memref<2x1x128xf32, #tpu.memory_space<vmem>>, vector<1x1x128xf32>
    %79 = vector.shape_cast %78 : vector<1x1x128xf32> to vector<1x128xf32>
    %80 = vector.broadcast %79 : vector<1x128xf32> to vector<16x128xf32>
    %81 = arith.addf %77, %80 : vector<16x128xf32>
    %cst_71 = arith.constant 0.000000e+00 : f32
    %82 = vector.broadcast %cst_71 : f32 to vector<16x128xf32>
    %83 = arith.maximumf %81, %82 : vector<16x128xf32>
    %84 = arith.extf %48 : vector<16x128xbf16> to vector<16x128xf32>
    %85 = arith.addf %83, %84 : vector<16x128xf32>
    %cst_72 = arith.constant 0.000000e+00 : f32
    %86 = vector.broadcast %cst_72 : f32 to vector<16x128xf32>
    %87 = arith.maximumf %85, %86 : vector<16x128xf32>
    %88 = arith.truncf %87 : vector<16x128xf32> to vector<16x128xbf16>
    %89 = vector.shape_cast %88 : vector<16x128xbf16> to vector<1x16x128xbf16>
    %c0_73 = arith.constant 0 : index
    %c0_74 = arith.constant 0 : index
    %c0_75 = arith.constant 0 : index
    %90 = vector.load %arg8[%c0_73, %c0_74, %c0_75] : memref<1x16x128xbf16, #tpu.memory_space<vmem>>, vector<1x16x128xbf16>
    tpu.vector_store %arg8[%c0_73, %c0_74, %c0_75], %89 {strides = array<i32>} : memref<1x16x128xbf16, #tpu.memory_space<vmem>>, vector<1x16x128xbf16>,
    return
  }
  func.func @transform_0(%arg0: i32) -> (i32, i32, i32) {
    %c0_i32 = arith.constant 0 : i32
    %c0_i32_0 = arith.constant 0 : i32
    %c0_i32_1 = arith.constant 0 : i32
    return %arg0, %c0_i32, %c0_i32_0 : i32, i32, i32
  }
  func.func @transform_1(%arg0: i32) -> (i32, i32, i32, i32) {
    %c0_i32 = arith.constant 0 : i32
    %c0_i32_0 = arith.constant 0 : i32
    %c0_i32_1 = arith.constant 0 : i32
    %c0_i32_2 = arith.constant 0 : i32
    %c0_i32_3 = arith.constant 0 : i32
    return %c0_i32, %c0_i32_0, %c0_i32_1, %c0_i32_2 : i32, i32, i32, i32
  }
  func.func @transform_2(%arg0: i32) -> (i32, i32, i32) {
    %c0_i32 = arith.constant 0 : i32
    %c0_i32_0 = arith.constant 0 : i32
    %c0_i32_1 = arith.constant 0 : i32
    %c0_i32_2 = arith.constant 0 : i32
    return %c0_i32, %c0_i32_0, %c0_i32_1 : i32, i32, i32
  }
  func.func @transform_3(%arg0: i32) -> (i32, i32, i32, i32) {
    %c0_i32 = arith.constant 0 : i32
    %c0_i32_0 = arith.constant 0 : i32
    %c0_i32_1 = arith.constant 0 : i32
    %c0_i32_2 = arith.constant 0 : i32
    %c0_i32_3 = arith.constant 0 : i32
    return %c0_i32, %c0_i32_0, %c0_i32_1, %c0_i32_2 : i32, i32, i32, i32
  }
  func.func @transform_4(%arg0: i32) -> (i32, i32, i32) {
    %c0_i32 = arith.constant 0 : i32
    %c0_i32_0 = arith.constant 0 : i32
    %c0_i32_1 = arith.constant 0 : i32
    %c0_i32_2 = arith.constant 0 : i32
    return %c0_i32, %c0_i32_0, %c0_i32_1 : i32, i32, i32
  }
  func.func @transform_5(%arg0: i32) -> (i32, i32, i32) {
    %c0_i32 = arith.constant 0 : i32
    %c0_i32_0 = arith.constant 0 : i32
    %c0_i32_1 = arith.constant 0 : i32
    %c0_i32_2 = arith.constant 0 : i32
    return %c0_i32, %c0_i32_0, %c0_i32_1 : i32, i32, i32
  }
  func.func @transform_6(%arg0: i32) -> (i32, i32, i32) {
    %c0_i32 = arith.constant 0 : i32
    %c0_i32_0 = arith.constant 0 : i32
    %c0_i32_1 = arith.constant 0 : i32
    %c0_i32_2 = arith.constant 0 : i32
    return %c0_i32, %c0_i32_0, %c0_i32_1 : i32, i32, i32
  }
  func.func @transform_7(%arg0: i32) -> (i32, i32, i32) {
    %c0_i32 = arith.constant 0 : i32
    %c0_i32_0 = arith.constant 0 : i32
    %c0_i32_1 = arith.constant 0 : i32
    return %arg0, %c0_i32, %c0_i32_0 : i32, i32, i32
  }
}

</mosaic_0001>

<llo_original>
// kernel: tpu_custom_call.1
$region0: #{tpu_custom_call.1}
  #allocation0 [shape = 'u32[]', space=smem, size = 0x4, offset = 0x4, fixed_abs, tag = 'smem constant byte address 0x4 - core index']
  #allocation1 [shape = 'u32[144,128]{1,0:T(1,128)}', space=vmem, size = 0x12000, scoped, tag = 'internal scratch']
  %s0 = inlined_call_operand.hbm [shape: bf16[2,16,128], index: 0, kind: input, shape index: {}]
  %s1 = inlined_call_operand.hbm [shape: bf16[2,2,128,128], index: 1, kind: input, shape index: {}]
  %s2 = inlined_call_operand.vmem [shape: f32[2,1,128], index: 2, kind: input, shape index: {}]
  %s3 = inlined_call_operand.hbm [shape: bf16[2,2,128,128], index: 3, kind: input, shape index: {}]
  %s4 = inlined_call_operand.vmem [shape: f32[2,1,128], index: 4, kind: input, shape index: {}]
  %s5 = inlined_call_operand.hbm [shape: bf16[1,128,128], index: 5, kind: input, shape index: {}]
  %s6 = inlined_call_operand.vmem [shape: f32[1,1,128], index: 6, kind: input, shape index: {}]
  %s7 = inlined_call_operand.hbm [shape: bf16[2,16,128], index: 7, kind: output, shape index: {}]
  %s8 = sld [smem:[#allocation0]]
  $region77: #{tpu_custom_call.1} parent=0
    _
  %s10 = ssub.s32 1, %s8
  %s11 = scalar_select 0, %s10, %s8
  $region1: #{tpu_custom_call.1} parent=0
    #allocation2 [shape = 'u8[8192]{0}', space=vmem, size = 0x2000, scoped, tag = 'input window, operand 0']
    #allocation3 [shape = 's32[2]{0}', space=sflag, size = 0x8, scoped, tag = 'scoped memory for tpu_custom_call.1']
    #allocation4 [shape = 's32[2]{0}', space=sflag, size = 0x8, scoped, tag = 'scoped memory for tpu_custom_call.1']
    #allocation5 [shape = 'u8[131072]{0}', space=vmem, size = 0x20000, scoped, tag = 'input window, operand 1, single buffered']
    #allocation6 [shape = 's32[1]{0}', space=sflag, size = 0x4, scoped, tag = 'scoped memory for tpu_custom_call.1']
    #allocation7 [shape = 'u8[131072]{0}', space=vmem, size = 0x20000, scoped, tag = 'input window, operand 3, single buffered']
    #allocation8 [shape = 'u8[32768]{0}', space=vmem, size = 0x8000, scoped, tag = 'input window, operand 5, single buffered']
    #allocation9 [shape = 's32[1]{0}', space=sflag, size = 0x4, scoped, tag = 'scoped memory for tpu_custom_call.1']
    #allocation10 [shape = 'u8[8192]{0}', space=vmem, size = 0x2000, scoped, tag = 'output window, operand 0']
    %12 = vsyncpa [#allocation3], 0
    %s13 = scalar_lea.sflag [#allocation3], 1
    %14 = vsyncpa %s13, 0
    %15 = vsyncpa [#allocation6], 0
    %16 = vsyncpa [#allocation9], 0
    %17 = vsyncpa [#allocation4], 0
    %s18 = scalar_lea.sflag [#allocation4], 1
    %19 = vsyncpa %s18, 0
    loop: start=0, step=1, limit=4
    $region2: #{tpu_custom_call.1} parent=1 // loop_pre_header
      _
    $region3: #{tpu_custom_call.1} parent=1 // loop_header
      %s21 = sphi 0, %s25
      %p22 = scmp.ge.s32.totalorder %s21, 4
      %s31 = sphi 0, %s33
      %s34 = sphi 0, %s31
      %s35 = sphi 0, %s34
      %s51 = sphi 0, %s35
      %s55 = sphi 0, %s55
      %s57 = sphi 0, %s55
      %s58 = sphi 0, %s57
      %s72 = sphi 0, %s58
      %s76 = sphi 0, %s76
      %s78 = sphi 0, %s76
      %s79 = sphi 0, %s78
      %s93 = sphi 0, %s79
      %s97 = sphi 0, %s97
      %s99 = sphi 0, %s97
      %s100 = sphi 0, %s99
      %s114 = sphi 0, %s100
      %s118 = sphi 0, %s118
      %s120 = sphi 0, %s118
      %s121 = sphi 0, %s120
      %s135 = sphi 0, %s121
      %s139 = sphi 0, %s139
      %s141 = sphi 0, %s139
      %s142 = sphi 0, %s141
      %s156 = sphi 0, %s142
      %s160 = sphi 0, %s160
      %s162 = sphi 0, %s160
      %s163 = sphi 0, %s162
      %s177 = sphi 0, %s163
      %s183 = sphi 0, %s185
      %s186 = sphi 0, %s183
      %s187 = sphi 0, %s186
      %s203 = sphi 0, %s187
    $region4: #{tpu_custom_call.1} parent=1 // loop_header_branch
      %24 = sbr.rel (%p22) target = $region8
    $region5: #{tpu_custom_call.1} parent=1 // loop_body
      %s26 = ssub.s32 %s21, 1
      %s27 = ssub.s32 %s21, 2
      %s28 = sadd.s32 %s21, 1
      %s29 = ssub.s32 %s21, %s28
      %p30 = scmp.eq.s32.totalorder %s29, 0
      %s32 = sadd.s32 %s31, 1
      %s33 = scalar_select %p30, %s31, %s32
      %p36 = pneg %p30
      %p37 = scmp.eq.s32.totalorder %s21, 1
      %p38 = por %p36, %p37
      %p39 = scmp.ne.s32.totalorder %s31, %s34
      %p40 = scmp.eq.s32.totalorder %s21, 0
      %p41 = por %p39, %p40
      %p42 = scmp.ne.s32.totalorder %s31, %s34
      %p43 = scmp.eq.s32.totalorder %s26, 1
      %p44 = por %p42, %p43
      %p45 = scmp.ne.s32.totalorder %s34, %s35
      %p46 = scmp.eq.s32.totalorder %s26, 0
      %p47 = por %p45, %p46
      %p48 = scmp.ne.s32.totalorder %s34, %s35
      %p49 = scmp.eq.s32.totalorder %s27, 1
      %p50 = por %p48, %p49
      %p52 = scmp.ne.s32.totalorder %s35, %s51
      %p53 = scmp.eq.s32.totalorder %s27, 0
      %p54 = por %p52, %p53
      %s56 = sadd.s32 %s55, 1
      %p59 = scmp.eq.s32.totalorder %s21, 1
      %p60 = scmp.ne.s32.totalorder %s55, %s57
      %p61 = scmp.eq.s32.totalorder %s21, 0
      %p62 = por %p60, %p61
      %p63 = scmp.ne.s32.totalorder %s55, %s57
      %p64 = scmp.eq.s32.totalorder %s26, 1
      %p65 = por %p63, %p64
      %p66 = scmp.ne.s32.totalorder %s57, %s58
      %p67 = scmp.eq.s32.totalorder %s26, 0
      %p68 = por %p66, %p67
      %p69 = scmp.ne.s32.totalorder %s57, %s58
      %p70 = scmp.eq.s32.totalorder %s27, 1
      %p71 = por %p69, %p70
      %p73 = scmp.ne.s32.totalorder %s58, %s72
      %p74 = scmp.eq.s32.totalorder %s27, 0
      %p75 = por %p73, %p74
      %s77 = sadd.s32 %s76, 1
      %p80 = scmp.eq.s32.totalorder %s21, 1
      %p81 = scmp.ne.s32.totalorder %s76, %s78
      %p82 = scmp.eq.s32.totalorder %s21, 0
      %p83 = por %p81, %p82
      %p84 = scmp.ne.s32.totalorder %s76, %s78
      %p85 = scmp.eq.s32.totalorder %s26, 1
      %p86 = por %p84, %p85
      %p87 = scmp.ne.s32.totalorder %s78, %s79
      %p88 = scmp.eq.s32.totalorder %s26, 0
      %p89 = por %p87, %p88
      %p90 = scmp.ne.s32.totalorder %s78, %s79
      %p91 = scmp.eq.s32.totalorder %s27, 1
      %p92 = por %p90, %p91
      %p94 = scmp.ne.s32.totalorder %s79, %s93
      %p95 = scmp.eq.s32.totalorder %s27, 0
      %p96 = por %p94, %p95
      %s98 = sadd.s32 %s97, 1
      %p101 = scmp.eq.s32.totalorder %s21, 1
      %p102 = scmp.ne.s32.totalorder %s97, %s99
      %p103 = scmp.eq.s32.totalorder %s21, 0
      %p104 = por %p102, %p103
      %p105 = scmp.ne.s32.totalorder %s97, %s99
      %p106 = scmp.eq.s32.totalorder %s26, 1
      %p107 = por %p105, %p106
      %p108 = scmp.ne.s32.totalorder %s99, %s100
      %p109 = scmp.eq.s32.totalorder %s26, 0
      %p110 = por %p108, %p109
      %p111 = scmp.ne.s32.totalorder %s99, %s100
      %p112 = scmp.eq.s32.totalorder %s27, 1
      %p113 = por %p111, %p112
      %p115 = scmp.ne.s32.totalorder %s100, %s114
      %p116 = scmp.eq.s32.totalorder %s27, 0
      %p117 = por %p115, %p116
      %s119 = sadd.s32 %s118, 1
      %p122 = scmp.eq.s32.totalorder %s21, 1
      %p123 = scmp.ne.s32.totalorder %s118, %s120
      %p124 = scmp.eq.s32.totalorder %s21, 0
      %p125 = por %p123, %p124
      %p126 = scmp.ne.s32.totalorder %s118, %s120
      %p127 = scmp.eq.s32.totalorder %s26, 1
      %p128 = por %p126, %p127
      %p129 = scmp.ne.s32.totalorder %s120, %s121
      %p130 = scmp.eq.s32.totalorder %s26, 0
      %p131 = por %p129, %p130
      %p132 = scmp.ne.s32.totalorder %s120, %s121
      %p133 = scmp.eq.s32.totalorder %s27, 1
      %p134 = por %p132, %p133
      %p136 = scmp.ne.s32.totalorder %s121, %s135
      %p137 = scmp.eq.s32.totalorder %s27, 0
      %p138 = por %p136, %p137
      %s140 = sadd.s32 %s139, 1
      %p143 = scmp.eq.s32.totalorder %s21, 1
      %p144 = scmp.ne.s32.totalorder %s139, %s141
      %p145 = scmp.eq.s32.totalorder %s21, 0
      %p146 = por %p144, %p145
      %p147 = scmp.ne.s32.totalorder %s139, %s141
      %p148 = scmp.eq.s32.totalorder %s26, 1
      %p149 = por %p147, %p148
      %p150 = scmp.ne.s32.totalorder %s141, %s142
      %p151 = scmp.eq.s32.totalorder %s26, 0
      %p152 = por %p150, %p151
      %p153 = scmp.ne.s32.totalorder %s141, %s142
      %p154 = scmp.eq.s32.totalorder %s27, 1
      %p155 = por %p153, %p154
      %p157 = scmp.ne.s32.totalorder %s142, %s156
      %p158 = scmp.eq.s32.totalorder %s27, 0
      %p159 = por %p157, %p158
      %s161 = sadd.s32 %s160, 1
      %p164 = scmp.eq.s32.totalorder %s21, 1
      %p165 = scmp.ne.s32.totalorder %s160, %s162
      %p166 = scmp.eq.s32.totalorder %s21, 0
      %p167 = por %p165, %p166
      %p168 = scmp.ne.s32.totalorder %s160, %s162
      %p169 = scmp.eq.s32.totalorder %s26, 1
      %p170 = por %p168, %p169
      %p171 = scmp.ne.s32.totalorder %s162, %s163
      %p172 = scmp.eq.s32.totalorder %s26, 0
      %p173 = por %p171, %p172
      %p174 = scmp.ne.s32.totalorder %s162, %s163
      %p175 = scmp.eq.s32.totalorder %s27, 1
      %p176 = por %p174, %p175
      %p178 = scmp.ne.s32.totalorder %s163, %s177
      %p179 = scmp.eq.s32.totalorder %s27, 0
      %p180 = por %p178, %p179
      %s181 = ssub.s32 %s21, %s28
      %p182 = scmp.eq.s32.totalorder %s181, 0
      %s184 = sadd.s32 %s183, 1
      %s185 = scalar_select %p182, %s183, %s184
      %p188 = pneg %p182
      %p189 = scmp.eq.s32.totalorder %s21, 1
      %p190 = por %p188, %p189
      %p191 = scmp.ne.s32.totalorder %s183, %s186
      %p192 = scmp.eq.s32.totalorder %s21, 0
      %p193 = por %p191, %p192
      %p194 = scmp.ne.s32.totalorder %s183, %s186
      %p195 = scmp.eq.s32.totalorder %s26, 1
      %p196 = por %p194, %p195
      %p197 = scmp.ne.s32.totalorder %s186, %s187
      %p198 = scmp.eq.s32.totalorder %s26, 0
      %p199 = por %p197, %p198
      %p200 = scmp.ne.s32.totalorder %s186, %s187
      %p201 = scmp.eq.s32.totalorder %s27, 1
      %p202 = por %p200, %p201
      %p204 = scmp.ne.s32.totalorder %s187, %s203
      %p205 = scmp.eq.s32.totalorder %s27, 0
      %p206 = por %p204, %p205
      %p207 = scmp.le.s32.totalorder 1, %s21
      %p208 = scmp.lt.s32.totalorder %s21, 3
      %p209 = pnand %p207, %p208
      %p210 = pneg %p209
      // Predicated region
      $region9: #{tpu_custom_call.1} parent=5 // pred_check
        _
      $region10: #{tpu_custom_call.1} parent=5 // pred_check_branch
        %212 = sbr.rel (%p209) target = $region12
      $region11: #{tpu_custom_call.1} parent=5 // pred_region
        %s213 = ssub.s32 %s21, 1
        // Predicated region
        $region13: #{tpu_custom_call.1} parent=11 // pred_check
          %p214 = pneg %p68
        $region14: #{tpu_custom_call.1} parent=11 // pred_check_branch
          %216 = sbr.rel (%p214) target = $region16
        $region15: #{tpu_custom_call.1} parent=11 // pred_region
          %s218 = ssub.s32 4096, 4096
          %219 = vsyncadd [#allocation6], %s218
          %s220 = sshll.u32 [#allocation5], 4
          %s221 = int_to_ptr.vmem [resolvable:$true] %s220
          %226 = dma.hbm_to_vmem [thread:$0]  %s1, 4096, %s221, [#allocation6], 64, 64, 4
        $region16: #{tpu_custom_call.1} parent=11 // pred_fallthru
          _
        // Predicated region
        $region17: #{tpu_custom_call.1} parent=11 // pred_check
          %p227 = pneg %p89
        $region18: #{tpu_custom_call.1} parent=11 // pred_check_branch
          %229 = sbr.rel (%p227) target = $region20
        $region19: #{tpu_custom_call.1} parent=11 // pred_region
          _
        $region20: #{tpu_custom_call.1} parent=11 // pred_fallthru
          _
        // Predicated region
        $region21: #{tpu_custom_call.1} parent=11 // pred_check
          %p230 = pneg %p110
        $region22: #{tpu_custom_call.1} parent=11 // pred_check_branch
          %232 = sbr.rel (%p230) target = $region24
        $region23: #{tpu_custom_call.1} parent=11 // pred_region
          %s234 = ssub.s32 4096, 4096
          %235 = vsyncadd [#allocation6], %s234
          %s236 = sshll.u32 [#allocation7], 4
          %s237 = int_to_ptr.vmem [resolvable:$true] %s236
          %242 = dma.hbm_to_vmem [thread:$0]  %s3, 4096, %s237, [#allocation6], 64, 64, 4
        $region24: #{tpu_custom_call.1} parent=11 // pred_fallthru
          _
        // Predicated region
        $region25: #{tpu_custom_call.1} parent=11 // pred_check
          %p243 = pneg %p131
        $region26: #{tpu_custom_call.1} parent=11 // pred_check_branch
          %245 = sbr.rel (%p243) target = $region28
        $region27: #{tpu_custom_call.1} parent=11 // pred_region
          _
        $region28: #{tpu_custom_call.1} parent=11 // pred_fallthru
          _
        // Predicated region
        $region29: #{tpu_custom_call.1} parent=11 // pred_check
          %p246 = pneg %p152
        $region30: #{tpu_custom_call.1} parent=11 // pred_check_branch
          %248 = sbr.rel (%p246) target = $region32
        $region31: #{tpu_custom_call.1} parent=11 // pred_region
          %s250 = ssub.s32 1024, 1024
          %251 = vsyncadd [#allocation9], %s250
          %s252 = sshll.u32 [#allocation8], 4
          %s253 = int_to_ptr.vmem [resolvable:$true] %s252
          %258 = dma.hbm_to_vmem [thread:$0]  %s5, 1024, %s253, [#allocation9], 64, 64, 4
        $region32: #{tpu_custom_call.1} parent=11 // pred_fallthru
          _
        // Predicated region
        $region33: #{tpu_custom_call.1} parent=11 // pred_check
          %p259 = pneg %p173
        $region34: #{tpu_custom_call.1} parent=11 // pred_check_branch
          %261 = sbr.rel (%p259) target = $region36
        $region35: #{tpu_custom_call.1} parent=11 // pred_region
          _
        $region36: #{tpu_custom_call.1} parent=11 // pred_fallthru
          _
      $region12: #{tpu_custom_call.1} parent=5 // pred_fallthru
        _
      %p262 = scmp.lt.s32.totalorder %s21, 2
      // Predicated region
      $region37: #{tpu_custom_call.1} parent=5 // pred_check
        %p263 = pneg %p262
      $region38: #{tpu_custom_call.1} parent=5 // pred_check_branch
        %265 = sbr.rel (%p263) target = $region40
      $region39: #{tpu_custom_call.1} parent=5 // pred_region
        // Predicated region
        $region41: #{tpu_custom_call.1} parent=39 // pred_check
          %p266 = pneg %p41
        $region42: #{tpu_custom_call.1} parent=39 // pred_check_branch
          %268 = sbr.rel (%p266) target = $region44
        $region43: #{tpu_custom_call.1} parent=39 // pred_region
          %s269 = sand.u32 %s31, 1
          %s270 = scalar_lea.sflag [#allocation3], %s269
          %s271 = sand.u32 %s31, 1
          %s272 = smul.addr %s271, 8
          %s273 = scalar_lea.vmem [#allocation2], %s272
          %s275 = ssub.s32 128, 128
          %276 = vsyncadd %s270, %s275
          %s277 = smul.addr %s21, 2
          %s278 = smul.addr %s277, 64
          %s279 = scalar_lea.hbm %s0, %s278
          %s280 = sshll.u32 %s273, 4
          %s281 = int_to_ptr.vmem [resolvable:$true] %s280
          %286 = dma.hbm_to_vmem [thread:$0]  %s279, 128, %s281, %s270, 64, 64, 4
        $region44: #{tpu_custom_call.1} parent=39 // pred_fallthru
          _
      $region40: #{tpu_custom_call.1} parent=5 // pred_fallthru
        _
      %p287 = scmp.le.s32.totalorder 1, %s21
      %p288 = scmp.lt.s32.totalorder %s21, 3
      %p289 = pnand %p287, %p288
      %p290 = pneg %p289
      // Predicated region
      $region45: #{tpu_custom_call.1} parent=5 // pred_check
        _
      $region46: #{tpu_custom_call.1} parent=5 // pred_check_branch
        %292 = sbr.rel (%p289) target = $region48
      $region47: #{tpu_custom_call.1} parent=5 // pred_region
        %s293 = ssub.s32 %s21, 1
        %s294 = sand.u32 %s34, 1
        %s295 = scalar_lea.sflag [#allocation3], %s294
        %s296 = sand.u32 %s34, 1
        %s297 = smul.addr %s296, 8
        %s298 = scalar_lea.vmem [#allocation2], %s297
        // Predicated region
        $region49: #{tpu_custom_call.1} parent=47 // pred_check
          %p299 = pneg %p47
        $region50: #{tpu_custom_call.1} parent=47 // pred_check_branch
          %301 = sbr.rel (%p299) target = $region52
        $region51: #{tpu_custom_call.1} parent=47 // pred_region
          %302 = dma.done %s295, 128
        $region52: #{tpu_custom_call.1} parent=47 // pred_fallthru
          _
        // Predicated region
        $region53: #{tpu_custom_call.1} parent=47 // pred_check
          %p303 = pneg %p68
        $region54: #{tpu_custom_call.1} parent=47 // pred_check_branch
          %305 = sbr.rel (%p303) target = $region56
        $region55: #{tpu_custom_call.1} parent=47 // pred_region
          %306 = dma.done [#allocation6], 4096
        $region56: #{tpu_custom_call.1} parent=47 // pred_fallthru
          _
        // Predicated region
        $region57: #{tpu_custom_call.1} parent=47 // pred_check
          %p307 = pneg %p110
        $region58: #{tpu_custom_call.1} parent=47 // pred_check_branch
          %309 = sbr.rel (%p307) target = $region60
        $region59: #{tpu_custom_call.1} parent=47 // pred_region
          %310 = dma.done [#allocation6], 4096
        $region60: #{tpu_custom_call.1} parent=47 // pred_fallthru
          _
        // Predicated region
        $region61: #{tpu_custom_call.1} parent=47 // pred_check
          %p311 = pneg %p152
        $region62: #{tpu_custom_call.1} parent=47 // pred_check_branch
          %313 = sbr.rel (%p311) target = $region64
        $region63: #{tpu_custom_call.1} parent=47 // pred_region
          %314 = dma.done [#allocation9], 1024
        $region64: #{tpu_custom_call.1} parent=47 // pred_fallthru
          _
        %s315 = sand.u32 %s34, 1
        %s316 = scalar_lea.sflag [#allocation3], %s315
        %s317 = sand.u32 %s34, 1
        %s318 = smul.addr %s317, 8
        %s319 = scalar_lea.vmem [#allocation2], %s318
        %p320 = pneg %p47
        %p321 = pneg %p44
        %p322 = pneg %p68
        %p323 = pneg %p65
        %p324 = pneg %p89
        %p325 = pneg %p86
        %p326 = pneg %p110
        %p327 = pneg %p107
        %p328 = pneg %p131
        %p329 = pneg %p128
        %p330 = pneg %p152
        %p331 = pneg %p149
        %p332 = pneg %p173
        %p333 = pneg %p170
        %p334 = pneg %p199
        %p335 = pneg %p196
        %s336 = sand.u32 %s186, 1
        %s337 = scalar_lea.sflag [#allocation4], %s336
        %s338 = sand.u32 %s186, 1
        %s339 = smul.addr %s338, 8
        %s340 = scalar_lea.vmem [#allocation10], %s339
        %v342 = vlaneseq
        %v343 = vshrl.u32 %v342, 7
        %v344 = vadd.s32 %v343, 8
        %v345 = vld [vmem:[%s298] sm:$0xf]
        %v346 = vld [vmem:[%s298 + $0x4] sm:$0xf]
        %s347 = scalar_lea.vmem [#allocation5], 64
        %v348 = vld [vmem:[%s347] sm:$0xf]
        %v349 = vld [vmem:[%s347 + $0x4] sm:$0xf]
        %v350 = vld [vmem:[%s347 + $0x8] sm:$0xf]
        %v351 = vld [vmem:[%s347 + $0xc] sm:$0xf]
        %v352 = vld [vmem:[%s347 + $0x10] sm:$0xf]
        %v353 = vld [vmem:[%s347 + $0x14] sm:$0xf]
        %v354 = vld [vmem:[%s347 + $0x18] sm:$0xf]
        %v355 = vld [vmem:[%s347 + $0x1c] sm:$0xf]
        %v356 = vld [vmem:[%s347 + $0x20] sm:$0xf]
        %v357 = vld [vmem:[%s347 + $0x24] sm:$0xf]
        %v358 = vld [vmem:[%s347 + $0x28] sm:$0xf]
        %v359 = vld [vmem:[%s347 + $0x2c] sm:$0xf]
        %v360 = vld [vmem:[%s347 + $0x30] sm:$0xf]
        %v361 = vld [vmem:[%s347 + $0x34] sm:$0xf]
        %v362 = vld [vmem:[%s347 + $0x38] sm:$0xf]
        %v363 = vld [vmem:[%s347 + $0x3c] sm:$0xf]
        %v364 = vld [vmem:[#allocation5] sm:$0xf]
        %v365 = vld [vmem:[#allocation5 + $0x4] sm:$0xf]
        %v366 = vld [vmem:[#allocation5 + $0x8] sm:$0xf]
        %v367 = vld [vmem:[#allocation5 + $0xc] sm:$0xf]
        %v368 = vld [vmem:[#allocation5 + $0x10] sm:$0xf]
        %v369 = vld [vmem:[#allocation5 + $0x14] sm:$0xf]
        %v370 = vld [vmem:[#allocation5 + $0x18] sm:$0xf]
        %v371 = vld [vmem:[#allocation5 + $0x1c] sm:$0xf]
        %v372 = vld [vmem:[#allocation5 + $0x20] sm:$0xf]
        %v373 = vld [vmem:[#allocation5 + $0x24] sm:$0xf]
        %v374 = vld [vmem:[#allocation5 + $0x28] sm:$0xf]
        %v375 = vld [vmem:[#allocation5 + $0x2c] sm:$0xf]
        %v376 = vld [vmem:[#allocation5 + $0x30] sm:$0xf]
        %v377 = vld [vmem:[#allocation5 + $0x34] sm:$0xf]
        %v378 = vld [vmem:[#allocation5 + $0x38] sm:$0xf]
        %v379 = vld [vmem:[#allocation5 + $0x3c] sm:$0xf]
        %v382 = vunpack.c.l.b16 %v345
        %v383 = vunpack.c.l.b16 %v346
        %v384 = vpack.c.b16 %v383, %v382
        %v402 = vunpack.c.l.b16 %v364
        %v403 = vunpack.c.l.b16 %v365
        %v404 = vunpack.c.l.b16 %v366
        %v405 = vunpack.c.l.b16 %v367
        %v406 = vunpack.c.l.b16 %v368
        %v407 = vunpack.c.l.b16 %v369
        %v408 = vunpack.c.l.b16 %v370
        %v409 = vunpack.c.l.b16 %v371
        %v410 = vunpack.c.l.b16 %v372
        %v411 = vunpack.c.l.b16 %v373
        %v412 = vunpack.c.l.b16 %v374
        %v413 = vunpack.c.l.b16 %v375
        %v414 = vunpack.c.l.b16 %v376
        %v415 = vunpack.c.l.b16 %v377
        %v416 = vunpack.c.l.b16 %v378
        %v417 = vunpack.c.l.b16 %v379
        %v418 = vpack.c.b16 %v403, %v402
        %v419 = vpack.c.b16 %v405, %v404
        %v420 = vpack.c.b16 %v407, %v406
        %v421 = vpack.c.b16 %v409, %v408
        %v422 = vpack.c.b16 %v411, %v410
        %v423 = vpack.c.b16 %v413, %v412
        %v424 = vpack.c.b16 %v415, %v414
        %v425 = vpack.c.b16 %v417, %v416
        %434 = vmatprep.subr.bf16.mxu0 0
        %435 = vmatpush1.bf16.msra.mxu0 %v418
        %436 = vmatprep.subr.bf16.mxu0 0
        %437 = vmatpush1.bf16.msra.mxu0 %v419
        %438 = vmatprep.subr.bf16.mxu0 0
        %439 = vmatpush1.bf16.msra.mxu0 %v420
        %440 = vmatprep.subr.bf16.mxu0 0
        %441 = vmatpush1.bf16.msra.mxu0 %v421
        %442 = vmatprep.subr.bf16.mxu0 0
        %443 = vmatpush1.bf16.msra.mxu0 %v422
        %444 = vmatprep.subr.bf16.mxu0 0
        %445 = vmatpush1.bf16.msra.mxu0 %v423
        %446 = vmatprep.subr.bf16.mxu0 0
        %447 = vmatpush1.bf16.msra.mxu0 %v424
        %448 = vmatprep.subr.bf16.mxu0 0
        %449 = vmatpush1.bf16.msra.mxu0 %v425
        %450 = vmatprep.subr.bf16.mxu0 0
        %451 = vmatpush1.bf16.msra.mxu0 0
        %452 = vmatprep.subr.bf16.mxu0 0
        %453 = vmatpush1.bf16.msra.mxu0 0
        %454 = vmatprep.subr.bf16.mxu0 0
        %455 = vmatpush1.bf16.msra.mxu0 0
        %456 = vmatprep.subr.bf16.mxu0 0
        %457 = vmatpush1.bf16.msra.mxu0 0
        %458 = vmatprep.subr.bf16.mxu0 0
        %459 = vmatpush1.bf16.msra.mxu0 0
        %460 = vmatprep.subr.bf16.mxu0 0
        %461 = vmatpush1.bf16.msra.mxu0 0
        %462 = vmatprep.subr.bf16.mxu0 0
        %463 = vmatpush1.bf16.msra.mxu0 0
        %464 = vmatprep.subr.bf16.mxu0 0
        %465 = vmatpush1.bf16.msra.mxu0 0
        %466 = vmatprep.mubr.bf16.mxu0 0
        %467 = vmatmul.mubr.bf16.gmra.mrb[0].mxu0 %v384
        %v468 = vpop.f32.mrb[0].mxu0
        %v469 = vadd.f32 0.0, %v468
        %v470 = vpop.f32.mrb[0].mxu0
        %v471 = vpop.f32.mrb[0].mxu0
        %v472 = vadd.f32 0.0, %v471
        %v473 = vpop.f32.mrb[0].mxu0
        %474 = vdwg.mxu0
        %v475 = vrot.slane %v469, 7
        %v476 = vrot.slane %v472, 7
        %vm477 = vcmp.lt.s32.totalorder %v343, 1
        %v478 = vsel %vm477, %v475, %v476
        %v479 = vsel %vm477, %v476, %v475
        %vm480 = vcmp.ge.s32.totalorder %v343, 1
        %vm481 = vcmp.ge.s32.totalorder %v344, 1
        %v482 = vsel %vm480, %v479, 0.0
        %v483 = vsel %vm481, %v478, 0.0
        %v500 = vunpack.c.l.b16 %v348
        %v501 = vunpack.c.l.b16 %v349
        %v502 = vunpack.c.l.b16 %v350
        %v503 = vunpack.c.l.b16 %v351
        %v504 = vunpack.c.l.b16 %v352
        %v505 = vunpack.c.l.b16 %v353
        %v506 = vunpack.c.l.b16 %v354
        %v507 = vunpack.c.l.b16 %v355
        %v508 = vunpack.c.l.b16 %v356
        %v509 = vunpack.c.l.b16 %v357
        %v510 = vunpack.c.l.b16 %v358
        %v511 = vunpack.c.l.b16 %v359
        %v512 = vunpack.c.l.b16 %v360
        %v513 = vunpack.c.l.b16 %v361
        %v514 = vunpack.c.l.b16 %v362
        %v515 = vunpack.c.l.b16 %v363
        %v516 = vpack.c.b16 %v501, %v500
        %v517 = vpack.c.b16 %v503, %v502
        %v518 = vpack.c.b16 %v505, %v504
        %v519 = vpack.c.b16 %v507, %v506
        %v520 = vpack.c.b16 %v509, %v508
        %v521 = vpack.c.b16 %v511, %v510
        %v522 = vpack.c.b16 %v513, %v512
        %v523 = vpack.c.b16 %v515, %v514
        %532 = vmatprep.subr.bf16.mxu0 0
        %533 = vmatpush1.bf16.msra.mxu0 %v516
        %534 = vmatprep.subr.bf16.mxu0 0
        %535 = vmatpush1.bf16.msra.mxu0 %v517
        %536 = vmatprep.subr.bf16.mxu0 0
        %537 = vmatpush1.bf16.msra.mxu0 %v518
        %538 = vmatprep.subr.bf16.mxu0 0
        %539 = vmatpush1.bf16.msra.mxu0 %v519
        %540 = vmatprep.subr.bf16.mxu0 0
        %541 = vmatpush1.bf16.msra.mxu0 %v520
        %542 = vmatprep.subr.bf16.mxu0 0
        %543 = vmatpush1.bf16.msra.mxu0 %v521
        %544 = vmatprep.subr.bf16.mxu0 0
        %545 = vmatpush1.bf16.msra.mxu0 %v522
        %546 = vmatprep.subr.bf16.mxu0 0
        %547 = vmatpush1.bf16.msra.mxu0 %v523
        %548 = vmatprep.subr.bf16.mxu0 0
        %549 = vmatpush1.bf16.msra.mxu0 0
        %550 = vmatprep.subr.bf16.mxu0 0
        %551 = vmatpush1.bf16.msra.mxu0 0
        %552 = vmatprep.subr.bf16.mxu0 0
        %553 = vmatpush1.bf16.msra.mxu0 0
        %554 = vmatprep.subr.bf16.mxu0 0
        %555 = vmatpush1.bf16.msra.mxu0 0
        %556 = vmatprep.subr.bf16.mxu0 0
        %557 = vmatpush1.bf16.msra.mxu0 0
        %558 = vmatprep.subr.bf16.mxu0 0
        %559 = vmatpush1.bf16.msra.mxu0 0
        %560 = vmatprep.subr.bf16.mxu0 0
        %561 = vmatpush1.bf16.msra.mxu0 0
        %562 = vmatprep.subr.bf16.mxu0 0
        %563 = vmatpush1.bf16.msra.mxu0 0
        %564 = vmatprep.mubr.bf16.mxu0 0
        %565 = vmatmul.mubr.bf16.gmra.mrb[0].mxu0 %v384
        %v566 = vpop.f32.mrb[0].mxu0
        %v567 = vadd.f32 %v482, %v566
        %v568 = vpop.f32.mrb[0].mxu0
        %v569 = vpop.f32.mrb[0].mxu0
        %v570 = vadd.f32 %v483, %v569
        %v571 = vpop.f32.mrb[0].mxu0
        %572 = vdwg.mxu0
        %v573 = vld [vmem:[%s2] sm:$0x1]
        %v575 = vlaneseq
        %v576 = vshrl.u32 %v575, 7
        %v577 = vsub.s32 0, %v576
        %v578 = vrot.slane %v573, %v577
        %v580 = vadd.f32 %v567, %v578
        %v581 = vadd.f32 %v570, %v578
        %v582 = vmax.f32 %v580, 0.0
        %v583 = vmax.f32 %v581, 0.0
        %v584 = vpack.c.bf16 %v583, %v582
        %s585 = scalar_lea.vmem [#allocation7], 64
        %v586 = vld [vmem:[%s585] sm:$0xf]
        %v587 = vld [vmem:[%s585 + $0x4] sm:$0xf]
        %v588 = vld [vmem:[%s585 + $0x8] sm:$0xf]
        %v589 = vld [vmem:[%s585 + $0xc] sm:$0xf]
        %v590 = vld [vmem:[%s585 + $0x10] sm:$0xf]
        %v591 = vld [vmem:[%s585 + $0x14] sm:$0xf]
        %v592 = vld [vmem:[%s585 + $0x18] sm:$0xf]
        %v593 = vld [vmem:[%s585 + $0x1c] sm:$0xf]
        %v594 = vld [vmem:[%s585 + $0x20] sm:$0xf]
        %v595 = vld [vmem:[%s585 + $0x24] sm:$0xf]
        %v596 = vld [vmem:[%s585 + $0x28] sm:$0xf]
        %v597 = vld [vmem:[%s585 + $0x2c] sm:$0xf]
        %v598 = vld [vmem:[%s585 + $0x30] sm:$0xf]
        %v599 = vld [vmem:[%s585 + $0x34] sm:$0xf]
        %v600 = vld [vmem:[%s585 + $0x38] sm:$0xf]
        %v601 = vld [vmem:[%s585 + $0x3c] sm:$0xf]
        %v602 = vld [vmem:[#allocation7] sm:$0xf]
        %v603 = vld [vmem:[#allocation7 + $0x4] sm:$0xf]
        %v604 = vld [vmem:[#allocation7 + $0x8] sm:$0xf]
        %v605 = vld [vmem:[#allocation7 + $0xc] sm:$0xf]
        %v606 = vld [vmem:[#allocation7 + $0x10] sm:$0xf]
        %v607 = vld [vmem:[#allocation7 + $0x14] sm:$0xf]
        %v608 = vld [vmem:[#allocation7 + $0x18] sm:$0xf]
        %v609 = vld [vmem:[#allocation7 + $0x1c] sm:$0xf]
        %v610 = vld [vmem:[#allocation7 + $0x20] sm:$0xf]
        %v611 = vld [vmem:[#allocation7 + $0x24] sm:$0xf]
        %v612 = vld [vmem:[#allocation7 + $0x28] sm:$0xf]
        %v613 = vld [vmem:[#allocation7 + $0x2c] sm:$0xf]
        %v614 = vld [vmem:[#allocation7 + $0x30] sm:$0xf]
        %v615 = vld [vmem:[#allocation7 + $0x34] sm:$0xf]
        %v616 = vld [vmem:[#allocation7 + $0x38] sm:$0xf]
        %v617 = vld [vmem:[#allocation7 + $0x3c] sm:$0xf]
        %v634 = vunpack.c.l.b16 %v602
        %v635 = vunpack.c.l.b16 %v603
        %v636 = vunpack.c.l.b16 %v604
        %v637 = vunpack.c.l.b16 %v605
        %v638 = vunpack.c.l.b16 %v606
        %v639 = vunpack.c.l.b16 %v607
        %v640 = vunpack.c.l.b16 %v608
        %v641 = vunpack.c.l.b16 %v609
        %v642 = vunpack.c.l.b16 %v610
        %v643 = vunpack.c.l.b16 %v611
        %v644 = vunpack.c.l.b16 %v612
        %v645 = vunpack.c.l.b16 %v613
        %v646 = vunpack.c.l.b16 %v614
        %v647 = vunpack.c.l.b16 %v615
        %v648 = vunpack.c.l.b16 %v616
        %v649 = vunpack.c.l.b16 %v617
        %v650 = vpack.c.b16 %v635, %v634
        %v651 = vpack.c.b16 %v637, %v636
        %v652 = vpack.c.b16 %v639, %v638
        %v653 = vpack.c.b16 %v641, %v640
        %v654 = vpack.c.b16 %v643, %v642
        %v655 = vpack.c.b16 %v645, %v644
        %v656 = vpack.c.b16 %v647, %v646
        %v657 = vpack.c.b16 %v649, %v648
        %666 = vmatprep.subr.bf16.mxu0 0
        %667 = vmatpush1.bf16.msra.mxu0 %v650
        %668 = vmatprep.subr.bf16.mxu0 0
        %669 = vmatpush1.bf16.msra.mxu0 %v651
        %670 = vmatprep.subr.bf16.mxu0 0
        %671 = vmatpush1.bf16.msra.mxu0 %v652
        %672 = vmatprep.subr.bf16.mxu0 0
        %673 = vmatpush1.bf16.msra.mxu0 %v653
        %674 = vmatprep.subr.bf16.mxu0 0
        %675 = vmatpush1.bf16.msra.mxu0 %v654
        %676 = vmatprep.subr.bf16.mxu0 0
        %677 = vmatpush1.bf16.msra.mxu0 %v655
        %678 = vmatprep.subr.bf16.mxu0 0
        %679 = vmatpush1.bf16.msra.mxu0 %v656
        %680 = vmatprep.subr.bf16.mxu0 0
        %681 = vmatpush1.bf16.msra.mxu0 %v657
        %682 = vmatprep.subr.bf16.mxu0 0
        %683 = vmatpush1.bf16.msra.mxu0 0
        %684 = vmatprep.subr.bf16.mxu0 0
        %685 = vmatpush1.bf16.msra.mxu0 0
        %686 = vmatprep.subr.bf16.mxu0 0
        %687 = vmatpush1.bf16.msra.mxu0 0
        %688 = vmatprep.subr.bf16.mxu0 0
        %689 = vmatpush1.bf16.msra.mxu0 0
        %690 = vmatprep.subr.bf16.mxu0 0
        %691 = vmatpush1.bf16.msra.mxu0 0
        %692 = vmatprep.subr.bf16.mxu0 0
        %693 = vmatpush1.bf16.msra.mxu0 0
        %694 = vmatprep.subr.bf16.mxu0 0
        %695 = vmatpush1.bf16.msra.mxu0 0
        %696 = vmatprep.subr.bf16.mxu0 0
        %697 = vmatpush1.bf16.msra.mxu0 0
        %698 = vmatprep.mubr.bf16.mxu0 0
        %699 = vmatmul.mubr.bf16.gmra.mrb[0].mxu0 %v584
        %v700 = vpop.f32.mrb[0].mxu0
        %v701 = vadd.f32 0.0, %v700
        %v702 = vpop.f32.mrb[0].mxu0
        %v703 = vpop.f32.mrb[0].mxu0
        %v704 = vadd.f32 0.0, %v703
        %v705 = vpop.f32.mrb[0].mxu0
        %706 = vdwg.mxu0
        %v707 = vrot.slane %v701, 7
        %v708 = vrot.slane %v704, 7
        %v709 = vsel %vm477, %v707, %v708
        %v710 = vsel %vm477, %v708, %v707
        %v711 = vsel %vm480, %v710, 0.0
        %v712 = vsel %vm481, %v709, 0.0
        %v729 = vunpack.c.l.b16 %v586
        %v730 = vunpack.c.l.b16 %v587
        %v731 = vunpack.c.l.b16 %v588
        %v732 = vunpack.c.l.b16 %v589
        %v733 = vunpack.c.l.b16 %v590
        %v734 = vunpack.c.l.b16 %v591
        %v735 = vunpack.c.l.b16 %v592
        %v736 = vunpack.c.l.b16 %v593
        %v737 = vunpack.c.l.b16 %v594
        %v738 = vunpack.c.l.b16 %v595
        %v739 = vunpack.c.l.b16 %v596
        %v740 = vunpack.c.l.b16 %v597
        %v741 = vunpack.c.l.b16 %v598
        %v742 = vunpack.c.l.b16 %v599
        %v743 = vunpack.c.l.b16 %v600
        %v744 = vunpack.c.l.b16 %v601
        %v745 = vpack.c.b16 %v730, %v729
        %v746 = vpack.c.b16 %v732, %v731
        %v747 = vpack.c.b16 %v734, %v733
        %v748 = vpack.c.b16 %v736, %v735
        %v749 = vpack.c.b16 %v738, %v737
        %v750 = vpack.c.b16 %v740, %v739
        %v751 = vpack.c.b16 %v742, %v741
        %v752 = vpack.c.b16 %v744, %v743
        %761 = vmatprep.subr.bf16.mxu0 0
        %762 = vmatpush1.bf16.msra.mxu0 %v745
        %763 = vmatprep.subr.bf16.mxu0 0
        %764 = vmatpush1.bf16.msra.mxu0 %v746
        %765 = vmatprep.subr.bf16.mxu0 0
        %766 = vmatpush1.bf16.msra.mxu0 %v747
        %767 = vmatprep.subr.bf16.mxu0 0
        %768 = vmatpush1.bf16.msra.mxu0 %v748
        %769 = vmatprep.subr.bf16.mxu0 0
        %770 = vmatpush1.bf16.msra.mxu0 %v749
        %771 = vmatprep.subr.bf16.mxu0 0
        %772 = vmatpush1.bf16.msra.mxu0 %v750
        %773 = vmatprep.subr.bf16.mxu0 0
        %774 = vmatpush1.bf16.msra.mxu0 %v751
        %775 = vmatprep.subr.bf16.mxu0 0
        %776 = vmatpush1.bf16.msra.mxu0 %v752
        %777 = vmatprep.subr.bf16.mxu0 0
        %778 = vmatpush1.bf16.msra.mxu0 0
        %779 = vmatprep.subr.bf16.mxu0 0
        %780 = vmatpush1.bf16.msra.mxu0 0
        %781 = vmatprep.subr.bf16.mxu0 0
        %782 = vmatpush1.bf16.msra.mxu0 0
        %783 = vmatprep.subr.bf16.mxu0 0
        %784 = vmatpush1.bf16.msra.mxu0 0
        %785 = vmatprep.subr.bf16.mxu0 0
        %786 = vmatpush1.bf16.msra.mxu0 0
        %787 = vmatprep.subr.bf16.mxu0 0
        %788 = vmatpush1.bf16.msra.mxu0 0
        %789 = vmatprep.subr.bf16.mxu0 0
        %790 = vmatpush1.bf16.msra.mxu0 0
        %791 = vmatprep.subr.bf16.mxu0 0
        %792 = vmatpush1.bf16.msra.mxu0 0
        %793 = vmatprep.mubr.bf16.mxu0 0
        %794 = vmatmul.mubr.bf16.gmra.mrb[0].mxu0 %v584
        %v795 = vpop.f32.mrb[0].mxu0
        %v796 = vadd.f32 %v711, %v795
        %v797 = vpop.f32.mrb[0].mxu0
        %v798 = vpop.f32.mrb[0].mxu0
        %v799 = vadd.f32 %v712, %v798
        %v800 = vpop.f32.mrb[0].mxu0
        %801 = vdwg.mxu0
        %v802 = vld [vmem:[%s4] sm:$0x1]
        %v804 = vlaneseq
        %v805 = vshrl.u32 %v804, 7
        %v806 = vsub.s32 0, %v805
        %v807 = vrot.slane %v802, %v806
        %v809 = vadd.f32 %v796, %v807
        %v810 = vadd.f32 %v799, %v807
        %v811 = vmax.f32 %v809, 0.0
        %v812 = vmax.f32 %v810, 0.0
        %v813 = vld [vmem:[#allocation8] sm:$0xf]
        %v814 = vld [vmem:[#allocation8 + $0x4] sm:$0xf]
        %v815 = vld [vmem:[#allocation8 + $0x8] sm:$0xf]
        %v816 = vld [vmem:[#allocation8 + $0xc] sm:$0xf]
        %v817 = vld [vmem:[#allocation8 + $0x10] sm:$0xf]
        %v818 = vld [vmem:[#allocation8 + $0x14] sm:$0xf]
        %v819 = vld [vmem:[#allocation8 + $0x18] sm:$0xf]
        %v820 = vld [vmem:[#allocation8 + $0x1c] sm:$0xf]
        %v821 = vld [vmem:[#allocation8 + $0x20] sm:$0xf]
        %v822 = vld [vmem:[#allocation8 + $0x24] sm:$0xf]
        %v823 = vld [vmem:[#allocation8 + $0x28] sm:$0xf]
        %v824 = vld [vmem:[#allocation8 + $0x2c] sm:$0xf]
        %v825 = vld [vmem:[#allocation8 + $0x30] sm:$0xf]
        %v826 = vld [vmem:[#allocation8 + $0x34] sm:$0xf]
        %v827 = vld [vmem:[#allocation8 + $0x38] sm:$0xf]
        %v828 = vld [vmem:[#allocation8 + $0x3c] sm:$0xf]
        %v829 = vld [vmem:[%s6] sm:$0x1]
        %v831 = vlaneseq
        %v832 = vshrl.u32 %v831, 7
        %v833 = vsub.s32 0, %v832
        %v834 = vrot.slane %v829, %v833
        %v852 = vunpack.c.l.b16 %v813
        %v853 = vunpack.c.l.b16 %v814
        %v854 = vunpack.c.l.b16 %v815
        %v855 = vunpack.c.l.b16 %v816
        %v856 = vunpack.c.l.b16 %v817
        %v857 = vunpack.c.l.b16 %v818
        %v858 = vunpack.c.l.b16 %v819
        %v859 = vunpack.c.l.b16 %v820
        %v860 = vunpack.c.l.b16 %v821
        %v861 = vunpack.c.l.b16 %v822
        %v862 = vunpack.c.l.b16 %v823
        %v863 = vunpack.c.l.b16 %v824
        %v864 = vunpack.c.l.b16 %v825
        %v865 = vunpack.c.l.b16 %v826
        %v866 = vunpack.c.l.b16 %v827
        %v867 = vunpack.c.l.b16 %v828
        %v868 = vpack.c.b16 %v853, %v852
        %v869 = vpack.c.b16 %v855, %v854
        %v870 = vpack.c.b16 %v857, %v856
        %v871 = vpack.c.b16 %v859, %v858
        %v872 = vpack.c.b16 %v861, %v860
        %v873 = vpack.c.b16 %v863, %v862
        %v874 = vpack.c.b16 %v865, %v864
        %v875 = vpack.c.b16 %v867, %v866
        %884 = vmatprep.subr.bf16.mxu0 0
        %885 = vmatpush1.bf16.msra.mxu0 %v868
        %886 = vmatprep.subr.bf16.mxu0 0
        %887 = vmatpush1.bf16.msra.mxu0 %v869
        %888 = vmatprep.subr.bf16.mxu0 0
        %889 = vmatpush1.bf16.msra.mxu0 %v870
        %890 = vmatprep.subr.bf16.mxu0 0
        %891 = vmatpush1.bf16.msra.mxu0 %v871
        %892 = vmatprep.subr.bf16.mxu0 0
        %893 = vmatpush1.bf16.msra.mxu0 %v872
        %894 = vmatprep.subr.bf16.mxu0 0
        %895 = vmatpush1.bf16.msra.mxu0 %v873
        %896 = vmatprep.subr.bf16.mxu0 0
        %897 = vmatpush1.bf16.msra.mxu0 %v874
        %898 = vmatprep.subr.bf16.mxu0 0
        %899 = vmatpush1.bf16.msra.mxu0 %v875
        %900 = vmatprep.subr.bf16.mxu0 0
        %901 = vmatpush1.bf16.msra.mxu0 0
        %902 = vmatprep.subr.bf16.mxu0 0
        %903 = vmatpush1.bf16.msra.mxu0 0
        %904 = vmatprep.subr.bf16.mxu0 0
        %905 = vmatpush1.bf16.msra.mxu0 0
        %906 = vmatprep.subr.bf16.mxu0 0
        %907 = vmatpush1.bf16.msra.mxu0 0
        %908 = vmatprep.subr.bf16.mxu0 0
        %909 = vmatpush1.bf16.msra.mxu0 0
        %910 = vmatprep.subr.bf16.mxu0 0
        %911 = vmatpush1.bf16.msra.mxu0 0
        %912 = vmatprep.subr.bf16.mxu0 0
        %913 = vmatpush1.bf16.msra.mxu0 0
        %914 = vmatprep.subr.bf16.mxu0 0
        %915 = vmatpush1.bf16.msra.mxu0 0
        %916 = vmatprep.mubr.bf16.mxu0 0
        %917 = vmatmul.mubr.bf16.gmra.mrb[0].mxu0 %v384
        %v918 = vpop.f32.mrb[0].mxu0
        %v919 = vadd.f32 %v834, %v918
        %v920 = vpop.f32.mrb[0].mxu0
        %v921 = vpop.f32.mrb[0].mxu0
        %v922 = vadd.f32 %v834, %v921
        %v923 = vpop.f32.mrb[0].mxu0
        %924 = vdwg.mxu0
        %v925 = vadd.f32 %v811, %v919
        %v926 = vadd.f32 %v812, %v922
        %v927 = vmax.f32 %v925, 0.0
        %v928 = vmax.f32 %v926, 0.0
        %v929 = vpack.c.bf16 %v928, %v927
        %s930 = scalar_lea.vmem [#allocation5], 192
        %v931 = vld [vmem:[%s930] sm:$0xf]
        %v932 = vld [vmem:[%s930 + $0x4] sm:$0xf]
        %v933 = vld [vmem:[%s930 + $0x8] sm:$0xf]
        %v934 = vld [vmem:[%s930 + $0xc] sm:$0xf]
        %v935 = vld [vmem:[%s930 + $0x10] sm:$0xf]
        %v936 = vld [vmem:[%s930 + $0x14] sm:$0xf]
        %v937 = vld [vmem:[%s930 + $0x18] sm:$0xf]
        %v938 = vld [vmem:[%s930 + $0x1c] sm:$0xf]
        %v939 = vld [vmem:[%s930 + $0x20] sm:$0xf]
        %v940 = vld [vmem:[%s930 + $0x24] sm:$0xf]
        %v941 = vld [vmem:[%s930 + $0x28] sm:$0xf]
        %v942 = vld [vmem:[%s930 + $0x2c] sm:$0xf]
        %v943 = vld [vmem:[%s930 + $0x30] sm:$0xf]
        %v944 = vld [vmem:[%s930 + $0x34] sm:$0xf]
        %v945 = vld [vmem:[%s930 + $0x38] sm:$0xf]
        %v946 = vld [vmem:[%s930 + $0x3c] sm:$0xf]
        %s947 = scalar_lea.vmem [#allocation5], 128
        %v948 = vld [vmem:[%s947] sm:$0xf]
        %v949 = vld [vmem:[%s947 + $0x4] sm:$0xf]
        %v950 = vld [vmem:[%s947 + $0x8] sm:$0xf]
        %v951 = vld [vmem:[%s947 + $0xc] sm:$0xf]
        %v952 = vld [vmem:[%s947 + $0x10] sm:$0xf]
        %v953 = vld [vmem:[%s947 + $0x14] sm:$0xf]
        %v954 = vld [vmem:[%s947 + $0x18] sm:$0xf]
        %v955 = vld [vmem:[%s947 + $0x1c] sm:$0xf]
        %v956 = vld [vmem:[%s947 + $0x20] sm:$0xf]
        %v957 = vld [vmem:[%s947 + $0x24] sm:$0xf]
        %v958 = vld [vmem:[%s947 + $0x28] sm:$0xf]
        %v959 = vld [vmem:[%s947 + $0x2c] sm:$0xf]
        %v960 = vld [vmem:[%s947 + $0x30] sm:$0xf]
        %v961 = vld [vmem:[%s947 + $0x34] sm:$0xf]
        %v962 = vld [vmem:[%s947 + $0x38] sm:$0xf]
        %v963 = vld [vmem:[%s947 + $0x3c] sm:$0xf]
        %v980 = vunpack.c.l.b16 %v948
        %v981 = vunpack.c.l.b16 %v949
        %v982 = vunpack.c.l.b16 %v950
        %v983 = vunpack.c.l.b16 %v951
        %v984 = vunpack.c.l.b16 %v952
        %v985 = vunpack.c.l.b16 %v953
        %v986 = vunpack.c.l.b16 %v954
        %v987 = vunpack.c.l.b16 %v955
        %v988 = vunpack.c.l.b16 %v956
        %v989 = vunpack.c.l.b16 %v957
        %v990 = vunpack.c.l.b16 %v958
        %v991 = vunpack.c.l.b16 %v959
        %v992 = vunpack.c.l.b16 %v960
        %v993 = vunpack.c.l.b16 %v961
        %v994 = vunpack.c.l.b16 %v962
        %v995 = vunpack.c.l.b16 %v963
        %v996 = vpack.c.b16 %v981, %v980
        %v997 = vpack.c.b16 %v983, %v982
        %v998 = vpack.c.b16 %v985, %v984
        %v999 = vpack.c.b16 %v987, %v986
        %v1000 = vpack.c.b16 %v989, %v988
        %v1001 = vpack.c.b16 %v991, %v990
        %v1002 = vpack.c.b16 %v993, %v992
        %v1003 = vpack.c.b16 %v995, %v994
        %1012 = vmatprep.subr.bf16.mxu0 0
        %1013 = vmatpush1.bf16.msra.mxu0 %v996
        %1014 = vmatprep.subr.bf16.mxu0 0
        %1015 = vmatpush1.bf16.msra.mxu0 %v997
        %1016 = vmatprep.subr.bf16.mxu0 0
        %1017 = vmatpush1.bf16.msra.mxu0 %v998
        %1018 = vmatprep.subr.bf16.mxu0 0
        %1019 = vmatpush1.bf16.msra.mxu0 %v999
        %1020 = vmatprep.subr.bf16.mxu0 0
        %1021 = vmatpush1.bf16.msra.mxu0 %v1000
        %1022 = vmatprep.subr.bf16.mxu0 0
        %1023 = vmatpush1.bf16.msra.mxu0 %v1001
        %1024 = vmatprep.subr.bf16.mxu0 0
        %1025 = vmatpush1.bf16.msra.mxu0 %v1002
        %1026 = vmatprep.subr.bf16.mxu0 0
        %1027 = vmatpush1.bf16.msra.mxu0 %v1003
        %1028 = vmatprep.subr.bf16.mxu0 0
        %1029 = vmatpush1.bf16.msra.mxu0 0
        %1030 = vmatprep.subr.bf16.mxu0 0
        %1031 = vmatpush1.bf16.msra.mxu0 0
        %1032 = vmatprep.subr.bf16.mxu0 0
        %1033 = vmatpush1.bf16.msra.mxu0 0
        %1034 = vmatprep.subr.bf16.mxu0 0
        %1035 = vmatpush1.bf16.msra.mxu0 0
        %1036 = vmatprep.subr.bf16.mxu0 0
        %1037 = vmatpush1.bf16.msra.mxu0 0
        %1038 = vmatprep.subr.bf16.mxu0 0
        %1039 = vmatpush1.bf16.msra.mxu0 0
        %1040 = vmatprep.subr.bf16.mxu0 0
        %1041 = vmatpush1.bf16.msra.mxu0 0
        %1042 = vmatprep.subr.bf16.mxu0 0
        %1043 = vmatpush1.bf16.msra.mxu0 0
        %1044 = vmatprep.mubr.bf16.mxu0 0
        %1045 = vmatmul.mubr.bf16.gmra.mrb[0].mxu0 %v929
        %v1046 = vpop.f32.mrb[0].mxu0
        %v1047 = vadd.f32 0.0, %v1046
        %v1048 = vpop.f32.mrb[0].mxu0
        %v1049 = vpop.f32.mrb[0].mxu0
        %v1050 = vadd.f32 0.0, %v1049
        %v1051 = vpop.f32.mrb[0].mxu0
        %1052 = vdwg.mxu0
        %v1053 = vrot.slane %v1047, 6
        %v1054 = vrot.slane %v1050, 6
        %vm1055 = vcmp.lt.s32.totalorder %v343, 2
        %v1056 = vsel %vm1055, %v1053, %v1054
        %v1057 = vsel %vm1055, %v1054, %v1053
        %vm1058 = vcmp.ge.s32.totalorder %v343, 2
        %vm1059 = vcmp.ge.s32.totalorder %v344, 2
        %v1060 = vsel %vm1058, %v1057, 0.0
        %v1061 = vsel %vm1059, %v1056, 0.0
        %v1078 = vunpack.c.l.b16 %v931
        %v1079 = vunpack.c.l.b16 %v932
        %v1080 = vunpack.c.l.b16 %v933
        %v1081 = vunpack.c.l.b16 %v934
        %v1082 = vunpack.c.l.b16 %v935
        %v1083 = vunpack.c.l.b16 %v936
        %v1084 = vunpack.c.l.b16 %v937
        %v1085 = vunpack.c.l.b16 %v938
        %v1086 = vunpack.c.l.b16 %v939
        %v1087 = vunpack.c.l.b16 %v940
        %v1088 = vunpack.c.l.b16 %v941
        %v1089 = vunpack.c.l.b16 %v942
        %v1090 = vunpack.c.l.b16 %v943
        %v1091 = vunpack.c.l.b16 %v944
        %v1092 = vunpack.c.l.b16 %v945
        %v1093 = vunpack.c.l.b16 %v946
        %v1094 = vpack.c.b16 %v1079, %v1078
        %v1095 = vpack.c.b16 %v1081, %v1080
        %v1096 = vpack.c.b16 %v1083, %v1082
        %v1097 = vpack.c.b16 %v1085, %v1084
        %v1098 = vpack.c.b16 %v1087, %v1086
        %v1099 = vpack.c.b16 %v1089, %v1088
        %v1100 = vpack.c.b16 %v1091, %v1090
        %v1101 = vpack.c.b16 %v1093, %v1092
        %1110 = vmatprep.subr.bf16.mxu0 0
        %1111 = vmatpush1.bf16.msra.mxu0 %v1094
        %1112 = vmatprep.subr.bf16.mxu0 0
        %1113 = vmatpush1.bf16.msra.mxu0 %v1095
        %1114 = vmatprep.subr.bf16.mxu0 0
        %1115 = vmatpush1.bf16.msra.mxu0 %v1096
        %1116 = vmatprep.subr.bf16.mxu0 0
        %1117 = vmatpush1.bf16.msra.mxu0 %v1097
        %1118 = vmatprep.subr.bf16.mxu0 0
        %1119 = vmatpush1.bf16.msra.mxu0 %v1098
        %1120 = vmatprep.subr.bf16.mxu0 0
        %1121 = vmatpush1.bf16.msra.mxu0 %v1099
        %1122 = vmatprep.subr.bf16.mxu0 0
        %1123 = vmatpush1.bf16.msra.mxu0 %v1100
        %1124 = vmatprep.subr.bf16.mxu0 0
        %1125 = vmatpush1.bf16.msra.mxu0 %v1101
        %1126 = vmatprep.subr.bf16.mxu0 0
        %1127 = vmatpush1.bf16.msra.mxu0 0
        %1128 = vmatprep.subr.bf16.mxu0 0
        %1129 = vmatpush1.bf16.msra.mxu0 0
        %1130 = vmatprep.subr.bf16.mxu0 0
        %1131 = vmatpush1.bf16.msra.mxu0 0
        %1132 = vmatprep.subr.bf16.mxu0 0
        %1133 = vmatpush1.bf16.msra.mxu0 0
        %1134 = vmatprep.subr.bf16.mxu0 0
        %1135 = vmatpush1.bf16.msra.mxu0 0
        %1136 = vmatprep.subr.bf16.mxu0 0
        %1137 = vmatpush1.bf16.msra.mxu0 0
        %1138 = vmatprep.subr.bf16.mxu0 0
        %1139 = vmatpush1.bf16.msra.mxu0 0
        %1140 = vmatprep.subr.bf16.mxu0 0
        %1141 = vmatpush1.bf16.msra.mxu0 0
        %1142 = vmatprep.mubr.bf16.mxu0 0
        %1143 = vmatmul.mubr.bf16.gmra.mrb[0].mxu0 %v929
        %v1144 = vpop.f32.mrb[0].mxu0
        %v1145 = vadd.f32 %v1060, %v1144
        %v1146 = vpop.f32.mrb[0].mxu0
        %v1147 = vpop.f32.mrb[0].mxu0
        %v1148 = vadd.f32 %v1061, %v1147
        %v1149 = vpop.f32.mrb[0].mxu0
        %1150 = vdwg.mxu0
        %s1151 = scalar_lea.vmem %s2, 1
        %v1152 = vld [vmem:[%s1151] sm:$0x1]
        %v1154 = vlaneseq
        %v1155 = vshrl.u32 %v1154, 7
        %v1156 = vsub.s32 0, %v1155
        %v1157 = vrot.slane %v1152, %v1156
        %v1159 = vadd.f32 %v1145, %v1157
        %v1160 = vadd.f32 %v1148, %v1157
        %v1161 = vmax.f32 %v1159, 0.0
        %v1162 = vmax.f32 %v1160, 0.0
        %v1163 = vpack.c.bf16 %v1162, %v1161
        %s1164 = scalar_lea.vmem [#allocation7], 192
        %v1165 = vld [vmem:[%s1164] sm:$0xf]
        %v1166 = vld [vmem:[%s1164 + $0x4] sm:$0xf]
        %v1167 = vld [vmem:[%s1164 + $0x8] sm:$0xf]
        %v1168 = vld [vmem:[%s1164 + $0xc] sm:$0xf]
        %v1169 = vld [vmem:[%s1164 + $0x10] sm:$0xf]
        %v1170 = vld [vmem:[%s1164 + $0x14] sm:$0xf]
        %v1171 = vld [vmem:[%s1164 + $0x18] sm:$0xf]
        %v1172 = vld [vmem:[%s1164 + $0x1c] sm:$0xf]
        %v1173 = vld [vmem:[%s1164 + $0x20] sm:$0xf]
        %v1174 = vld [vmem:[%s1164 + $0x24] sm:$0xf]
        %v1175 = vld [vmem:[%s1164 + $0x28] sm:$0xf]
        %v1176 = vld [vmem:[%s1164 + $0x2c] sm:$0xf]
        %v1177 = vld [vmem:[%s1164 + $0x30] sm:$0xf]
        %v1178 = vld [vmem:[%s1164 + $0x34] sm:$0xf]
        %v1179 = vld [vmem:[%s1164 + $0x38] sm:$0xf]
        %v1180 = vld [vmem:[%s1164 + $0x3c] sm:$0xf]
        %s1181 = scalar_lea.vmem [#allocation7], 128
        %v1182 = vld [vmem:[%s1181] sm:$0xf]
        %v1183 = vld [vmem:[%s1181 + $0x4] sm:$0xf]
        %v1184 = vld [vmem:[%s1181 + $0x8] sm:$0xf]
        %v1185 = vld [vmem:[%s1181 + $0xc] sm:$0xf]
        %v1186 = vld [vmem:[%s1181 + $0x10] sm:$0xf]
        %v1187 = vld [vmem:[%s1181 + $0x14] sm:$0xf]
        %v1188 = vld [vmem:[%s1181 + $0x18] sm:$0xf]
        %v1189 = vld [vmem:[%s1181 + $0x1c] sm:$0xf]
        %v1190 = vld [vmem:[%s1181 + $0x20] sm:$0xf]
        %v1191 = vld [vmem:[%s1181 + $0x24] sm:$0xf]
        %v1192 = vld [vmem:[%s1181 + $0x28] sm:$0xf]
        %v1193 = vld [vmem:[%s1181 + $0x2c] sm:$0xf]
        %v1194 = vld [vmem:[%s1181 + $0x30] sm:$0xf]
        %v1195 = vld [vmem:[%s1181 + $0x34] sm:$0xf]
        %v1196 = vld [vmem:[%s1181 + $0x38] sm:$0xf]
        %v1197 = vld [vmem:[%s1181 + $0x3c] sm:$0xf]
        %v1214 = vunpack.c.l.b16 %v1182
        %v1215 = vunpack.c.l.b16 %v1183
        %v1216 = vunpack.c.l.b16 %v1184
        %v1217 = vunpack.c.l.b16 %v1185
        %v1218 = vunpack.c.l.b16 %v1186
        %v1219 = vunpack.c.l.b16 %v1187
        %v1220 = vunpack.c.l.b16 %v1188
        %v1221 = vunpack.c.l.b16 %v1189
        %v1222 = vunpack.c.l.b16 %v1190
        %v1223 = vunpack.c.l.b16 %v1191
        %v1224 = vunpack.c.l.b16 %v1192
        %v1225 = vunpack.c.l.b16 %v1193
        %v1226 = vunpack.c.l.b16 %v1194
        %v1227 = vunpack.c.l.b16 %v1195
        %v1228 = vunpack.c.l.b16 %v1196
        %v1229 = vunpack.c.l.b16 %v1197
        %v1230 = vpack.c.b16 %v1215, %v1214
        %v1231 = vpack.c.b16 %v1217, %v1216
        %v1232 = vpack.c.b16 %v1219, %v1218
        %v1233 = vpack.c.b16 %v1221, %v1220
        %v1234 = vpack.c.b16 %v1223, %v1222
        %v1235 = vpack.c.b16 %v1225, %v1224
        %v1236 = vpack.c.b16 %v1227, %v1226
        %v1237 = vpack.c.b16 %v1229, %v1228
        %1246 = vmatprep.subr.bf16.mxu0 0
        %1247 = vmatpush1.bf16.msra.mxu0 %v1230
        %1248 = vmatprep.subr.bf16.mxu0 0
        %1249 = vmatpush1.bf16.msra.mxu0 %v1231
        %1250 = vmatprep.subr.bf16.mxu0 0
        %1251 = vmatpush1.bf16.msra.mxu0 %v1232
        %1252 = vmatprep.subr.bf16.mxu0 0
        %1253 = vmatpush1.bf16.msra.mxu0 %v1233
        %1254 = vmatprep.subr.bf16.mxu0 0
        %1255 = vmatpush1.bf16.msra.mxu0 %v1234
        %1256 = vmatprep.subr.bf16.mxu0 0
        %1257 = vmatpush1.bf16.msra.mxu0 %v1235
        %1258 = vmatprep.subr.bf16.mxu0 0
        %1259 = vmatpush1.bf16.msra.mxu0 %v1236
        %1260 = vmatprep.subr.bf16.mxu0 0
        %1261 = vmatpush1.bf16.msra.mxu0 %v1237
        %1262 = vmatprep.subr.bf16.mxu0 0
        %1263 = vmatpush1.bf16.msra.mxu0 0
        %1264 = vmatprep.subr.bf16.mxu0 0
        %1265 = vmatpush1.bf16.msra.mxu0 0
        %1266 = vmatprep.subr.bf16.mxu0 0
        %1267 = vmatpush1.bf16.msra.mxu0 0
        %1268 = vmatprep.subr.bf16.mxu0 0
        %1269 = vmatpush1.bf16.msra.mxu0 0
        %1270 = vmatprep.subr.bf16.mxu0 0
        %1271 = vmatpush1.bf16.msra.mxu0 0
        %1272 = vmatprep.subr.bf16.mxu0 0
        %1273 = vmatpush1.bf16.msra.mxu0 0
        %1274 = vmatprep.subr.bf16.mxu0 0
        %1275 = vmatpush1.bf16.msra.mxu0 0
        %1276 = vmatprep.subr.bf16.mxu0 0
        %1277 = vmatpush1.bf16.msra.mxu0 0
        %1278 = vmatprep.mubr.bf16.mxu0 0
        %1279 = vmatmul.mubr.bf16.gmra.mrb[0].mxu0 %v1163
        %v1280 = vpop.f32.mrb[0].mxu0
        %v1281 = vadd.f32 0.0, %v1280
        %v1282 = vpop.f32.mrb[0].mxu0
        %v1283 = vpop.f32.mrb[0].mxu0
        %v1284 = vadd.f32 0.0, %v1283
        %v1285 = vpop.f32.mrb[0].mxu0
        %1286 = vdwg.mxu0
        %v1287 = vrot.slane %v1281, 6
        %v1288 = vrot.slane %v1284, 6
        %v1289 = vsel %vm1055, %v1287, %v1288
        %v1290 = vsel %vm1055, %v1288, %v1287
        %v1291 = vsel %vm1058, %v1290, 0.0
        %v1292 = vsel %vm1059, %v1289, 0.0
        %v1309 = vunpack.c.l.b16 %v1165
        %v1310 = vunpack.c.l.b16 %v1166
        %v1311 = vunpack.c.l.b16 %v1167
        %v1312 = vunpack.c.l.b16 %v1168
        %v1313 = vunpack.c.l.b16 %v1169
        %v1314 = vunpack.c.l.b16 %v1170
        %v1315 = vunpack.c.l.b16 %v1171
        %v1316 = vunpack.c.l.b16 %v1172
        %v1317 = vunpack.c.l.b16 %v1173
        %v1318 = vunpack.c.l.b16 %v1174
        %v1319 = vunpack.c.l.b16 %v1175
        %v1320 = vunpack.c.l.b16 %v1176
        %v1321 = vunpack.c.l.b16 %v1177
        %v1322 = vunpack.c.l.b16 %v1178
        %v1323 = vunpack.c.l.b16 %v1179
        %v1324 = vunpack.c.l.b16 %v1180
        %v1325 = vpack.c.b16 %v1310, %v1309
        %v1326 = vpack.c.b16 %v1312, %v1311
        %v1327 = vpack.c.b16 %v1314, %v1313
        %v1328 = vpack.c.b16 %v1316, %v1315
        %v1329 = vpack.c.b16 %v1318, %v1317
        %v1330 = vpack.c.b16 %v1320, %v1319
        %v1331 = vpack.c.b16 %v1322, %v1321
        %v1332 = vpack.c.b16 %v1324, %v1323
        %1341 = vmatprep.subr.bf16.mxu0 0
        %1342 = vmatpush1.bf16.msra.mxu0 %v1325
        %1343 = vmatprep.subr.bf16.mxu0 0
        %1344 = vmatpush1.bf16.msra.mxu0 %v1326
        %1345 = vmatprep.subr.bf16.mxu0 0
        %1346 = vmatpush1.bf16.msra.mxu0 %v1327
        %1347 = vmatprep.subr.bf16.mxu0 0
        %1348 = vmatpush1.bf16.msra.mxu0 %v1328
        %1349 = vmatprep.subr.bf16.mxu0 0
        %1350 = vmatpush1.bf16.msra.mxu0 %v1329
        %1351 = vmatprep.subr.bf16.mxu0 0
        %1352 = vmatpush1.bf16.msra.mxu0 %v1330
        %1353 = vmatprep.subr.bf16.mxu0 0
        %1354 = vmatpush1.bf16.msra.mxu0 %v1331
        %1355 = vmatprep.subr.bf16.mxu0 0
        %1356 = vmatpush1.bf16.msra.mxu0 %v1332
        %1357 = vmatprep.subr.bf16.mxu0 0
        %1358 = vmatpush1.bf16.msra.mxu0 0
        %1359 = vmatprep.subr.bf16.mxu0 0
        %1360 = vmatpush1.bf16.msra.mxu0 0
        %1361 = vmatprep.subr.bf16.mxu0 0
        %1362 = vmatpush1.bf16.msra.mxu0 0
        %1363 = vmatprep.subr.bf16.mxu0 0
        %1364 = vmatpush1.bf16.msra.mxu0 0
        %1365 = vmatprep.subr.bf16.mxu0 0
        %1366 = vmatpush1.bf16.msra.mxu0 0
        %1367 = vmatprep.subr.bf16.mxu0 0
        %1368 = vmatpush1.bf16.msra.mxu0 0
        %1369 = vmatprep.subr.bf16.mxu0 0
        %1370 = vmatpush1.bf16.msra.mxu0 0
        %1371 = vmatprep.subr.bf16.mxu0 0
        %1372 = vmatpush1.bf16.msra.mxu0 0
        %1373 = vmatprep.mubr.bf16.mxu0 0
        %1374 = vmatmul.mubr.bf16.gmra.mrb[0].mxu0 %v1163
        %v1375 = vpop.f32.mrb[0].mxu0
        %v1376 = vadd.f32 %v1291, %v1375
        %v1377 = vpop.f32.mrb[0].mxu0
        %v1378 = vpop.f32.mrb[0].mxu0
        %v1379 = vadd.f32 %v1292, %v1378
        %v1380 = vpop.f32.mrb[0].mxu0
        %1381 = vdwg.mxu0
        %s1382 = scalar_lea.vmem %s4, 1
        %v1383 = vld [vmem:[%s1382] sm:$0x1]
        %v1385 = vlaneseq
        %v1386 = vshrl.u32 %v1385, 7
        %v1387 = vsub.s32 0, %v1386
        %v1388 = vrot.slane %v1383, %v1387
        %v1390 = vadd.f32 %v1376, %v1388
        %v1391 = vadd.f32 %v1379, %v1388
        %v1392 = vmax.f32 %v1390, 0.0
        %v1393 = vmax.f32 %v1391, 0.0
        %v1394 = vunpack.c.l.bf16 %v929
        %v1395 = vunpack.c.h.bf16 %v929
        %v1396 = vadd.f32 %v1392, %v1394
        %v1397 = vadd.f32 %v1393, %v1395
        %v1398 = vmax.f32 %v1396, 0.0
        %v1399 = vmax.f32 %v1397, 0.0
        %v1400 = vpack.c.bf16 %v1399, %v1398
        %v1402 = vunpack.c.l.b16 %v1400
        %v1403 = vunpack.c.h.b16 %v1400
        %v1404 = vpack.c.b16 %v1402, %v1402
        %v1405 = vpack.c.b16 %v1403, %v1403
        %1408 = vst [vmem:[%s340] sm:$0xf] %v1404
        %1409 = vst [vmem:[%s340 + $0x4] sm:$0xf] %v1405
        %s1410 = sand.u32 %s186, 1
        %s1411 = scalar_lea.sflag [#allocation4], %s1410
        %s1412 = sand.u32 %s186, 1
        %s1413 = smul.addr %s1412, 8
        %s1414 = scalar_lea.vmem [#allocation10], %s1413
        // Predicated region
        $region65: #{tpu_custom_call.1} parent=47 // pred_check
          %p1415 = pneg %p196
        $region66: #{tpu_custom_call.1} parent=47 // pred_check_branch
          %1417 = sbr.rel (%p1415) target = $region68
        $region67: #{tpu_custom_call.1} parent=47 // pred_region
          %s1419 = ssub.s32 128, 128
          %1420 = vsyncadd %s1411, %s1419
          %s1421 = smul.addr %s26, 2
          %s1422 = smul.addr %s1421, 64
          %s1423 = scalar_lea.hbm %s7, %s1422
          %s1424 = sshll.u32 %s1414, 4
          %s1425 = int_to_ptr.vmem [resolvable:$true] %s1424
          %1430 = dma.vmem_to_hbm [thread:$0]  %s1425, 128, %s1423, %s1411, 64, 64, 4
        $region68: #{tpu_custom_call.1} parent=47 // pred_fallthru
          _
      $region48: #{tpu_custom_call.1} parent=5 // pred_fallthru
        _
      %p1431 = scmp.le.s32.totalorder 2, %s21
      // Predicated region
      $region69: #{tpu_custom_call.1} parent=5 // pred_check
        %p1432 = pneg %p1431
      $region70: #{tpu_custom_call.1} parent=5 // pred_check_branch
        %1434 = sbr.rel (%p1432) target = $region72
      $region71: #{tpu_custom_call.1} parent=5 // pred_region
        %s1435 = ssub.s32 %s21, 2
        // Predicated region
        $region73: #{tpu_custom_call.1} parent=71 // pred_check
          %p1436 = pneg %p202
        $region74: #{tpu_custom_call.1} parent=71 // pred_check_branch
          %1438 = sbr.rel (%p1436) target = $region76
        $region75: #{tpu_custom_call.1} parent=71 // pred_region
          %s1439 = sand.u32 %s187, 1
          %s1440 = scalar_lea.sflag [#allocation4], %s1439
          %s1441 = sand.u32 %s187, 1
          %s1442 = smul.addr %s1441, 8
          %s1443 = scalar_lea.vmem [#allocation10], %s1442
          %1444 = dma.done %s1440, 128
        $region76: #{tpu_custom_call.1} parent=71 // pred_fallthru
          _
      $region72: #{tpu_custom_call.1} parent=5 // pred_fallthru
        _
    $region6: #{tpu_custom_call.1} parent=1 // loop_footer
      %s25 = sadd.s32 1, %s21
    $region7: #{tpu_custom_call.1} parent=1 // loop_footer_branch
      %20 = sbr.rel target = $region3
    $region8: #{tpu_custom_call.1} parent=1 // loop_exit
      _
    %1445 = vsyncpa [#allocation3], 1
    %s1446 = scalar_lea.sflag [#allocation3], 1
    %1447 = vsyncpa %s1446, 1
    %1448 = vsyncpa [#allocation6], 1
    %1449 = vsyncpa [#allocation9], 1
    %1450 = vsyncpa [#allocation4], 1
    %s1451 = scalar_lea.sflag [#allocation4], 1
    %1452 = vsyncpa %s1451, 1

</llo_original>
